<compile_context>
chip_gen: v7x
topology: tpu7x:2x2x1
jax: 0.10.0
libtpu: 0.0.40
codegen_flags: <defaults>
</compile_context>

<pallas_src>
import functools
from dataclasses import dataclass

import jax
import jax.numpy as jnp
from jax.experimental import pallas as pl
from jax.experimental.pallas import tpu as pltpu


@dataclass(frozen=True)
class Cfg:
    dim: int = 16                   # code channels
    pointwise: bool = True
    zero_clamp: bool = True
    stabalize: bool = True
    pos_intra_weight: float = 1.0
    class_intra_weight: float = 0.0  # class-supervised branch disabled (needs .pt data)
    feature_samples: int = 11
    use_salience: bool = False
    mode: str = "mean"


def _helper_kernel(f_ref, c_ref, shift_ref, cd_ref, a_ref, b_ref, s_ref,
                   *, pointwise, zero_clamp, stabalize):
    """One batch element of helper(f, f, c, c, shift).

    f_ref:     (HW, Cf) features, channels-last
    c_ref:     (HW, Cd) code, channels-last
    shift_ref: (HW, 1)
    cd_ref:    (HW, HW) unclamped code correlation (helper's second output)
    a_ref, b_ref, s_ref: (1, 1) per-batch partial sums used by the wrapper to
    finish loss.mean() exactly:
        a = sum(cd_cl * fd_local) - sum(shift * rowsum(cd_cl))
        b = sum(cd_cl)
        s = sum(fd)                        (for the pointwise global-mean term)
        loss.mean() = -( sum_n a_n + old_mean * sum_n b_n ) / count
        with old_mean = sum_n s_n / count  (only when pointwise)
    """
    eps = 1e-10

    def _l2norm(x):
        # F.normalize(t, dim=1, eps) == x * rsqrt(max(sum(x^2), eps^2));
        # rsqrt runs on the EUP slot, keeping VALU slots free.
        ss = jnp.sum(x * x, axis=-1, keepdims=True)
        return x * jax.lax.rsqrt(jnp.maximum(ss, eps * eps))

    # f1 == f2 and c1 == c2 in the live forward path: normalize once, reuse.
    fn = _l2norm(f_ref[...])
    cn = _l2norm(c_ref[...])

    # tensor_correlation per batch: (HW, C) contracted with (HW, C) over C,
    # i.e. the standard q @ k^T MXU form (no in-kernel relayout of the LHS).
    dnums = (((1,), (1,)), ((), ()))
    fd = jax.lax.dot_general(fn, fn, dnums, preferred_element_type=jnp.float32)
    cd = jax.lax.dot_general(cn, cn, dnums, preferred_element_type=jnp.float32)
    # TODO(synk): on v6e/v7x bf16 MXU operands would halve operand bandwidth,
    # but cd values near the 0.0/0.8 clamp edges may flip sides; MXU is not the
    # bottleneck at these shapes, so f32 is kept.

    cd_ref[...] = cd  # lane-dense when HW is a multiple of 128

    min_val = 0.0 if zero_clamp else -9999.0
    cd_cl = jnp.clip(cd, min_val, 0.8) if stabalize else jnp.maximum(cd, min_val)

    if pointwise:
        # fd_corrected = fd - mean(fd over q) + global_mean(fd).
        # (torch's extra "- fd.mean()" after the row subtraction is exactly 0;
        #  the global mean couples batches, so it is applied in the wrapper.)
        row_mean = jnp.mean(fd, axis=1, keepdims=True)            # (HW, 1)
        fd_local = fd - row_mean
        s_ref[...] = jnp.sum(row_mean, axis=0, keepdims=True) * float(fd.shape[1])
    else:
        fd_local = fd
        s_ref[...] = jnp.zeros_like(s_ref)

    # Fold shift and the full reduction into per-row sums: the (HW, HW) loss
    # tensor is never materialized.
    rowsum_cd = jnp.sum(cd_cl, axis=1, keepdims=True)             # (HW, 1)
    a_rows = jnp.sum(cd_cl * fd_local, axis=1, keepdims=True)     # (HW, 1)
    a_rows = a_rows - shift_ref[...] * rowsum_cd
    a_ref[...] = jnp.sum(a_rows, axis=0, keepdims=True)           # (1, 1)
    b_ref[...] = jnp.sum(rowsum_cd, axis=0, keepdims=True)        # (1, 1)


def _helper_same(feats_nchw, code_nchw, shifts_nhw, cfg):
    """helper(f, f, c, c, shift) with deduplicated operands.

    Returns (loss.mean(), cd) with cd in torch's 'nhwij' layout.
    """
    N, Cf, H, W = feats_nchw.shape
    Cd = code_nchw.shape[1]
    HW = H * W

    def to_hw_c(x):  # NCHW -> (N, HW, C); cheap wrapper-side relayout, done once
        n, c, h, w = x.shape
        return jnp.transpose(x.reshape(n, c, h * w), (0, 2, 1)).astype(jnp.float32)

    f = to_hw_c(feats_nchw)
    c = to_hw_c(code_nchw)
    shift = shifts_nhw.reshape(N, HW, 1).astype(jnp.float32)

    kernel = functools.partial(
        _helper_kernel,
        pointwise=cfg.pointwise,
        zero_clamp=cfg.zero_clamp,
        stabalize=cfg.stabalize,
    )

    # Grid over N (parallel -> megacore on v7x); each step handles one batch
    # element with bounded VMEM.  TODO(synk): for production HW*HW sizes, also
    # tile the q axis (last dim of fd/cd) with a two-pass rowmean.
    cd, a, b, s = pl.pallas_call(
        kernel,
        grid=(N,),
        in_specs=[
            pl.BlockSpec((None, HW, Cf), lambda n: (n, 0, 0)),
            pl.BlockSpec((None, HW, Cd), lambda n: (n, 0, 0)),
            pl.BlockSpec((None, HW, 1), lambda n: (n, 0, 0)),
        ],
        out_specs=(
            pl.BlockSpec((None, HW, HW), lambda n: (n, 0, 0)),
            pl.BlockSpec((None, 1, 1), lambda n: (n, 0, 0)),
            pl.BlockSpec((None, 1, 1), lambda n: (n, 0, 0)),
            pl.BlockSpec((None, 1, 1), lambda n: (n, 0, 0)),
        ),
        out_shape=(
            jax.ShapeDtypeStruct((N, HW, HW), jnp.float32),
            jax.ShapeDtypeStruct((N, 1, 1), jnp.float32),
            jax.ShapeDtypeStruct((N, 1, 1), jnp.float32),
            jax.ShapeDtypeStruct((N, 1, 1), jnp.float32),
        ),
        compiler_params=pltpu.CompilerParams(
            dimension_semantics=("parallel",),
            vmem_limit_bytes=32 * 1024 * 1024,
        ),
    )(f, c, shift)

    # Finish the (exact) loss mean from the per-batch partial sums.
    count = float(N * HW * HW)
    a_tot = jnp.sum(a)
    if cfg.pointwise:
        old_mean = jnp.sum(s) / count
        loss_mean = -(a_tot + old_mean * jnp.sum(b)) / count
    else:
        loss_mean = -a_tot / count

    return loss_mean, cd.reshape(N, H, W, H, W)


def contrastive_correlation_loss_forward(cfg, orig_feats, orig_code_BG, orig_code_C,
                                         ref_code_c, ref_code_bg, shifts):
    """Mirrors ContrastiveCorrelationLoss.forward for class_intra_weight == 0.

    NOTE: the random coordinate sampling (coords1/coords2) in the reference
    forward is never consumed downstream, so it cannot affect the outputs and
    is omitted.
    """
    zero = jnp.zeros((), jnp.float32)

    if cfg.pos_intra_weight > 0:
        # forward calls helper(orig_feats, orig_feats, orig_code_C, orig_code_C, ...)
        pos_intra_loss_C, pos_intra_cd_C = _helper_same(
            orig_feats, orig_code_C, shifts, cfg)
    else:
        pos_intra_loss_C = pos_intra_cd_C = zero

    if cfg.class_intra_weight > 0:
        # TODO(synk): class-supervised branch (generate_prototypes / generate_class_maps)
        # requires externally loaded Kvectors_*.pt prototype data and data-dependent
        # per-class grouping; not implemented here.
        raise NotImplementedError("class-supervised branch requires external .pt data")
    else:
        class_intra_loss_BG = class_intra_cd_BG = zero
        class_intra_loss_C = class_intra_cd_C = zero

    return (pos_intra_loss_C, pos_intra_cd_C,
            class_intra_loss_BG, class_intra_cd_BG,
            class_intra_loss_C, class_intra_cd_C)


def _reference(cfg, feats, code, shifts):
    """Pure-JAX reference of the enabled (pos_intra) path, NCHW like the torch code."""
    def _norm(t):
        n = jnp.sqrt(jnp.sum(t * t, axis=1, keepdims=True))
        return t / jnp.maximum(n, 1e-10)

    fd = jnp.einsum('nchw,ncij->nhwij', _norm(feats), _norm(feats))
    cd = jnp.einsum('nchw,ncij->nhwij', _norm(code), _norm(code))
    if cfg.pointwise:
        old_mean = fd.mean()
        fd = fd - fd.mean(axis=(3, 4), keepdims=True)
        fd = fd - fd.mean() + old_mean
    shift = shifts[:, :, :, None, None]
    min_val = 0.0 if cfg.zero_clamp else -9999.0
    cd_cl = jnp.clip(cd, min_val, 0.8) if cfg.stabalize else jnp.maximum(cd, min_val)
    loss = -cd_cl * (fd - shift)
    return loss.mean(), cd


if __name__ == "__main__":
    cfg = Cfg()

    key = jax.random.PRNGKey(0)
    k1, k2, k3, k4, k5, k6 = jax.random.split(key, 6)

    # HW = 16*16 = 256 (multiple of 128) -> lane-dense cd stores.
    N, Cf, H, W = 2, 32, 16, 16
    Cd = cfg.dim

    orig_feats = jax.random.normal(k1, (N, Cf, H, W), jnp.float32)
    orig_code_BG = jax.random.normal(k2, (N, Cd, H, W), jnp.float32)
    orig_code_C = jax.random.normal(k3, (N, Cd, H, W), jnp.float32)
    ref_code_c = jax.random.normal(k4, (N, Cd, H, W), jnp.float32)
    ref_code_bg = jax.random.normal(k5, (N, Cd, H, W), jnp.float32)
    shifts = jax.random.uniform(k6, (N, H, W), jnp.float32) * 0.3

    outs = contrastive_correlation_loss_forward(
        cfg, orig_feats, orig_code_BG, orig_code_C, ref_code_c, ref_code_bg, shifts)
    outs = jax.block_until_ready(outs)

    pos_loss, pos_cd = outs[0], outs[1]
    ref_loss, ref_cd = _reference(cfg, orig_feats, orig_code_C, shifts)

    assert pos_cd.shape == (N, H, W, H, W)
    assert jnp.allclose(pos_loss, ref_loss, atol=1e-3, rtol=1e-3), (pos_loss, ref_loss)
    assert jnp.allclose(pos_cd, ref_cd, atol=1e-3, rtol=1e-3)

    print("KERNEL_OK")
</pallas_src>

<mosaic_0001>
module attributes {stable_mosaic.version = 11 : i64} {
  func.func @_helper_kernel(%arg0: i32, %arg1: memref<1x256x32xf32, #tpu.memory_space<vmem>>, %arg2: memref<1x256x16xf32, #tpu.memory_space<vmem>>, %arg3: memref<1x256x1xf32, #tpu.memory_space<vmem>>, %arg4: memref<1x256x256xf32, #tpu.memory_space<vmem>>, %arg5: memref<1x1x1xf32, #tpu.memory_space<vmem>>, %arg6: memref<1x1x1xf32, #tpu.memory_space<vmem>>, %arg7: memref<1x1x1xf32, #tpu.memory_space<vmem>>) attributes {dimension_semantics = [#tpu.dimension_semantics<parallel>], iteration_bounds = array<i64: 2>, scalar_prefetch = 0 : i64, scratch_operands = 0 : i64, tpu.core_type = #tpu.core_type<tc>, window_params = [{transform_indices = @transform_0, window_bounds = array<i64: 1, 256, 32>}, {transform_indices = @transform_1, window_bounds = array<i64: 1, 256, 16>}, {transform_indices = @transform_2, window_bounds = array<i64: 1, 256, 1>}, {transform_indices = @transform_3, window_bounds = array<i64: 1, 256, 256>}, {transform_indices = @transform_4, window_bounds = array<i64: 1, 1, 1>}, {transform_indices = @transform_5, window_bounds = array<i64: 1, 1, 1>}, {transform_indices = @transform_6, window_bounds = array<i64: 1, 1, 1>}]} {
    %c0 = arith.constant 0 : index
    %c0_0 = arith.constant 0 : index
    %c0_1 = arith.constant 0 : index
    %0 = vector.load %arg1[%c0, %c0_0, %c0_1] : memref<1x256x32xf32, #tpu.memory_space<vmem>>, vector<1x256x32xf32>
    %1 = vector.shape_cast %0 : vector<1x256x32xf32> to vector<256x32xf32>
    %2 = arith.mulf %1, %1 : vector<256x32xf32>
    %cst = arith.constant dense<0.000000e+00> : vector<256xf32>
    %3 = vector.multi_reduction <add>, %2, %cst [1] : vector<256x32xf32> to vector<256xf32>
    %4 = vector.shape_cast %3 : vector<256xf32> to vector<256x1xf32>
    %cst_2 = arith.constant 9.99999968E-21 : f32
    %5 = vector.broadcast %cst_2 : f32 to vector<256x1xf32>
    %6 = arith.maximumf %4, %5 : vector<256x1xf32>
    %7 = math.rsqrt %6 : vector<256x1xf32>
    %8 = vector.broadcast %7 : vector<256x1xf32> to vector<256x32xf32>
    %9 = arith.mulf %1, %8 : vector<256x32xf32>
    %c0_3 = arith.constant 0 : index
    %c0_4 = arith.constant 0 : index
    %c0_5 = arith.constant 0 : index
    %10 = vector.load %arg2[%c0_3, %c0_4, %c0_5] : memref<1x256x16xf32, #tpu.memory_space<vmem>>, vector<1x256x16xf32>
    %11 = vector.shape_cast %10 : vector<1x256x16xf32> to vector<256x16xf32>
    %12 = arith.mulf %11, %11 : vector<256x16xf32>
    %cst_6 = arith.constant dense<0.000000e+00> : vector<256xf32>
    %13 = vector.multi_reduction <add>, %12, %cst_6 [1] : vector<256x16xf32> to vector<256xf32>
    %14 = vector.shape_cast %13 : vector<256xf32> to vector<256x1xf32>
    %cst_7 = arith.constant 9.99999968E-21 : f32
    %15 = vector.broadcast %cst_7 : f32 to vector<256x1xf32>
    %16 = arith.maximumf %14, %15 : vector<256x1xf32>
    %17 = math.rsqrt %16 : vector<256x1xf32>
    %18 = vector.broadcast %17 : vector<256x1xf32> to vector<256x16xf32>
    %19 = arith.mulf %11, %18 : vector<256x16xf32>
    %cst_8 = arith.constant dense<0.000000e+00> : vector<256x256xf32>
    %20 = tpu.matmul %9, %9, %cst_8 {dimension_numbers = #tpu.dot_dimension_numbers<[1], [1], [0], [0], [0, 0, 1, 0], [], []>} : vector<256x32xf32>, vector<256x32xf32>, vector<256x256xf32> -> vector<256x256xf32>
    %cst_9 = arith.constant dense<0.000000e+00> : vector<256x256xf32>
    %21 = tpu.matmul %19, %19, %cst_9 {dimension_numbers = #tpu.dot_dimension_numbers<[1], [1], [0], [0], [0, 0, 1, 0], [], []>} : vector<256x16xf32>, vector<256x16xf32>, vector<256x256xf32> -> vector<256x256xf32>
    %c0_10 = arith.constant 0 : index
    %c0_11 = arith.constant 0 : index
    %c0_12 = arith.constant 0 : index
    %22 = vector.load %arg4[%c0_10, %c0_11, %c0_12] : memref<1x256x256xf32, #tpu.memory_space<vmem>>, vector<1x256x256xf32>
    %23 = vector.shape_cast %22 : vector<1x256x256xf32> to vector<256x256xf32>
    %24 = vector.shape_cast %21 : vector<256x256xf32> to vector<1x256x256xf32>
    tpu.vector_store %arg4[%c0_10, %c0_11, %c0_12], %24 {strides = array<i32>} : memref<1x256x256xf32, #tpu.memory_space<vmem>>, vector<1x256x256xf32>,
    %cst_13 = arith.constant 0.000000e+00 : f32
    %cst_14 = arith.constant 8.000000e-01 : f32
    %25 = vector.broadcast %cst_13 : f32 to vector<256x256xf32>
    %26 = arith.maximumf %25, %21 : vector<256x256xf32>
    %27 = vector.broadcast %cst_14 : f32 to vector<256x256xf32>
    %28 = arith.minimumf %27, %26 : vector<256x256xf32>
    %cst_15 = arith.constant dense<0.000000e+00> : vector<256xf32>
    %29 = vector.multi_reduction <add>, %20, %cst_15 [1] : vector<256x256xf32> to vector<256xf32>
    %30 = vector.shape_cast %29 : vector<256xf32> to vector<256x1xf32>
    %cst_16 = arith.constant 2.560000e+02 : f32
    %31 = vector.broadcast %cst_16 : f32 to vector<256x1xf32>
    %32 = arith.divf %30, %31 : vector<256x1xf32>
    %33 = vector.broadcast %32 : vector<256x1xf32> to vector<256x256xf32>
    %34 = arith.subf %20, %33 : vector<256x256xf32>
    %cst_17 = arith.constant dense<0.000000e+00> : vector<1xf32>
    %35 = vector.multi_reduction <add>, %32, %cst_17 [0] : vector<256x1xf32> to vector<1xf32>
    %36 = vector.shape_cast %35 : vector<1xf32> to vector<1x1xf32>
    %cst_18 = arith.constant 2.560000e+02 : f32
    %37 = vector.broadcast %cst_18 : f32 to vector<1x1xf32>
    %38 = arith.mulf %36, %37 : vector<1x1xf32>
    %c0_19 = arith.constant 0 : index
    %c0_20 = arith.constant 0 : index
    %c0_21 = arith.constant 0 : index
    %39 = vector.load %arg7[%c0_19, %c0_20, %c0_21] : memref<1x1x1xf32, #tpu.memory_space<vmem>>, vector<1x1x1xf32>
    %40 = vector.shape_cast %39 : vector<1x1x1xf32> to vector<1x1xf32>
    %41 = vector.shape_cast %38 : vector<1x1xf32> to vector<1x1x1xf32>
    tpu.vector_store %arg7[%c0_19, %c0_20, %c0_21], %41 {strides = array<i32>} : memref<1x1x1xf32, #tpu.memory_space<vmem>>, vector<1x1x1xf32>,
    %cst_22 = arith.constant dense<0.000000e+00> : vector<256xf32>
    %42 = vector.multi_reduction <add>, %28, %cst_22 [1] : vector<256x256xf32> to vector<256xf32>
    %43 = vector.shape_cast %42 : vector<256xf32> to vector<256x1xf32>
    %44 = arith.mulf %28, %34 : vector<256x256xf32>
    %cst_23 = arith.constant dense<0.000000e+00> : vector<256xf32>
    %45 = vector.multi_reduction <add>, %44, %cst_23 [1] : vector<256x256xf32> to vector<256xf32>
    %46 = vector.shape_cast %45 : vector<256xf32> to vector<256x1xf32>
    %c0_24 = arith.constant 0 : index
    %c0_25 = arith.constant 0 : index
    %c0_26 = arith.constant 0 : index
    %47 = vector.load %arg3[%c0_24, %c0_25, %c0_26] : memref<1x256x1xf32, #tpu.memory_space<vmem>>, vector<1x256x1xf32>
    %48 = vector.shape_cast %47 : vector<1x256x1xf32> to vector<256x1xf32>
    %49 = arith.mulf %48, %43 : vector<256x1xf32>
    %50 = arith.subf %46, %49 : vector<256x1xf32>
    %cst_27 = arith.constant dense<0.000000e+00> : vector<1xf32>
    %51 = vector.multi_reduction <add>, %50, %cst_27 [0] : vector<256x1xf32> to vector<1xf32>
    %52 = vector.shape_cast %51 : vector<1xf32> to vector<1x1xf32>
    %c0_28 = arith.constant 0 : index
    %c0_29 = arith.constant 0 : index
    %c0_30 = arith.constant 0 : index
    %53 = vector.load %arg5[%c0_28, %c0_29, %c0_30] : memref<1x1x1xf32, #tpu.memory_space<vmem>>, vector<1x1x1xf32>
    %54 = vector.shape_cast %53 : vector<1x1x1xf32> to vector<1x1xf32>
    %55 = vector.shape_cast %52 : vector<1x1xf32> to vector<1x1x1xf32>
    tpu.vector_store %arg5[%c0_28, %c0_29, %c0_30], %55 {strides = array<i32>} : memref<1x1x1xf32, #tpu.memory_space<vmem>>, vector<1x1x1xf32>,
    %cst_31 = arith.constant dense<0.000000e+00> : vector<1xf32>
    %56 = vector.multi_reduction <add>, %43, %cst_31 [0] : vector<256x1xf32> to vector<1xf32>
    %57 = vector.shape_cast %56 : vector<1xf32> to vector<1x1xf32>
    %c0_32 = arith.constant 0 : index
    %c0_33 = arith.constant 0 : index
    %c0_34 = arith.constant 0 : index
    %58 = vector.load %arg6[%c0_32, %c0_33, %c0_34] : memref<1x1x1xf32, #tpu.memory_space<vmem>>, vector<1x1x1xf32>
    %59 = vector.shape_cast %58 : vector<1x1x1xf32> to vector<1x1xf32>
    %60 = vector.shape_cast %57 : vector<1x1xf32> to vector<1x1x1xf32>
    tpu.vector_store %arg6[%c0_32, %c0_33, %c0_34], %60 {strides = array<i32>} : memref<1x1x1xf32, #tpu.memory_space<vmem>>, vector<1x1x1xf32>,
    return
  }
  func.func @transform_0(%arg0: i32) -> (i32, i32, i32) {
    %c0_i32 = arith.constant 0 : i32
    %c0_i32_0 = arith.constant 0 : i32
    %c0_i32_1 = arith.constant 0 : i32
    return %arg0, %c0_i32, %c0_i32_0 : i32, i32, i32
  }
  func.func @transform_1(%arg0: i32) -> (i32, i32, i32) {
    %c0_i32 = arith.constant 0 : i32
    %c0_i32_0 = arith.constant 0 : i32
    %c0_i32_1 = arith.constant 0 : i32
    return %arg0, %c0_i32, %c0_i32_0 : i32, i32, i32
  }
  func.func @transform_2(%arg0: i32) -> (i32, i32, i32) {
    %c0_i32 = arith.constant 0 : i32
    %c0_i32_0 = arith.constant 0 : i32
    %c0_i32_1 = arith.constant 0 : i32
    return %arg0, %c0_i32, %c0_i32_0 : i32, i32, i32
  }
  func.func @transform_3(%arg0: i32) -> (i32, i32, i32) {
    %c0_i32 = arith.constant 0 : i32
    %c0_i32_0 = arith.constant 0 : i32
    %c0_i32_1 = arith.constant 0 : i32
    return %arg0, %c0_i32, %c0_i32_0 : i32, i32, i32
  }
  func.func @transform_4(%arg0: i32) -> (i32, i32, i32) {
    %c0_i32 = arith.constant 0 : i32
    %c0_i32_0 = arith.constant 0 : i32
    %c0_i32_1 = arith.constant 0 : i32
    return %arg0, %c0_i32, %c0_i32_0 : i32, i32, i32
  }
  func.func @transform_5(%arg0: i32) -> (i32, i32, i32) {
    %c0_i32 = arith.constant 0 : i32
    %c0_i32_0 = arith.constant 0 : i32
    %c0_i32_1 = arith.constant 0 : i32
    return %arg0, %c0_i32, %c0_i32_0 : i32, i32, i32
  }
  func.func @transform_6(%arg0: i32) -> (i32, i32, i32) {
    %c0_i32 = arith.constant 0 : i32
    %c0_i32_0 = arith.constant 0 : i32
    %c0_i32_1 = arith.constant 0 : i32
    return %arg0, %c0_i32, %c0_i32_0 : i32, i32, i32
  }
}

</mosaic_0001>

<llo_original>
// kernel: tpu_custom_call.1
$region0: #{tpu_custom_call.1}
  #allocation0 [shape = 'u32[]', space=smem, size = 0x4, offset = 0x4, fixed_abs, tag = 'smem constant byte address 0x4 - core index']
  #allocation1 [shape = 'u32[144,128]{1,0:T(1,128)}', space=vmem, size = 0x12000, scoped, tag = 'internal scratch']
  %s0 = inlined_call_operand.vmem [shape: f32[2,256,32], index: 0, kind: input, shape index: {}]
  %s1 = inlined_call_operand.vmem [shape: f32[2,256,16], index: 1, kind: input, shape index: {}]
  %s2 = inlined_call_operand.vmem [shape: f32[2,256,1], index: 2, kind: input, shape index: {}]
  %s3 = inlined_call_operand.hbm [shape: f32[2,256,256], index: 3, kind: output, shape index: {0}]
  %s4 = inlined_call_operand.vmem [shape: f32[2,1,1], index: 4, kind: output, shape index: {1}]
  %s5 = inlined_call_operand.vmem [shape: f32[2,1,1], index: 5, kind: output, shape index: {2}]
  %s6 = inlined_call_operand.vmem [shape: f32[2,1,1], index: 6, kind: output, shape index: {3}]
  %7 = xla_tuple %s3, %s4, %s5, %s6
  %s8 = sld [smem:[#allocation0]]
  $region69: #{tpu_custom_call.1} parent=0
    _
  %s10 = ssub.s32 1, %s8
  %s11 = scalar_select 0, %s10, %s8
  $region1: #{tpu_custom_call.1} parent=0
    #allocation2 [shape = 'u8[524288]{0}', space=vmem, size = 0x80000, scoped, tag = 'output window, operand 0']
    #allocation3 [shape = 's32[2]{0}', space=sflag, size = 0x8, scoped, tag = 'scoped memory for tpu_custom_call.1']
    %12 = vsyncpa [#allocation3], 0
    %s13 = scalar_lea.sflag [#allocation3], 1
    %14 = vsyncpa %s13, 0
    loop: start=0, step=1, limit=4
    $region2: #{tpu_custom_call.1} parent=1 // loop_pre_header
      _
    $region3: #{tpu_custom_call.1} parent=1 // loop_header
      %s16 = sphi 0, %s20
      %p17 = scmp.ge.s32.totalorder %s16, 4
      %s26 = sphi 0, %s28
      %s29 = sphi 0, %s26
      %s30 = sphi 0, %s29
      %s46 = sphi 0, %s30
      %s52 = sphi 0, %s54
      %s55 = sphi 0, %s52
      %s56 = sphi 0, %s55
      %s72 = sphi 0, %s56
      %s78 = sphi 0, %s80
      %s81 = sphi 0, %s78
      %s82 = sphi 0, %s81
      %s98 = sphi 0, %s82
      %s104 = sphi 0, %s106
      %s107 = sphi 0, %s104
      %s108 = sphi 0, %s107
      %s124 = sphi 0, %s108
      %s130 = sphi 0, %s132
      %s133 = sphi 0, %s130
      %s134 = sphi 0, %s133
      %s150 = sphi 0, %s134
      %s156 = sphi 0, %s158
      %s159 = sphi 0, %s156
      %s160 = sphi 0, %s159
      %s176 = sphi 0, %s160
      %s182 = sphi 0, %s184
      %s185 = sphi 0, %s182
      %s186 = sphi 0, %s185
      %s202 = sphi 0, %s186
    $region4: #{tpu_custom_call.1} parent=1 // loop_header_branch
      %19 = sbr.rel (%p17) target = $region8
    $region5: #{tpu_custom_call.1} parent=1 // loop_body
      %s21 = ssub.s32 %s16, 1
      %s22 = ssub.s32 %s16, 2
      %s23 = sadd.s32 %s16, 1
      %s24 = ssub.s32 %s16, %s23
      %p25 = scmp.eq.s32.totalorder %s24, 0
      %s27 = sadd.s32 %s26, 1
      %s28 = scalar_select %p25, %s26, %s27
      %p31 = pneg %p25
      %p32 = scmp.eq.s32.totalorder %s16, 1
      %p33 = por %p31, %p32
      %p34 = scmp.ne.s32.totalorder %s26, %s29
      %p35 = scmp.eq.s32.totalorder %s16, 0
      %p36 = por %p34, %p35
      %p37 = scmp.ne.s32.totalorder %s26, %s29
      %p38 = scmp.eq.s32.totalorder %s21, 1
      %p39 = por %p37, %p38
      %p40 = scmp.ne.s32.totalorder %s29, %s30
      %p41 = scmp.eq.s32.totalorder %s21, 0
      %p42 = por %p40, %p41
      %p43 = scmp.ne.s32.totalorder %s29, %s30
      %p44 = scmp.eq.s32.totalorder %s22, 1
      %p45 = por %p43, %p44
      %p47 = scmp.ne.s32.totalorder %s30, %s46
      %p48 = scmp.eq.s32.totalorder %s22, 0
      %p49 = por %p47, %p48
      %s50 = ssub.s32 %s16, %s23
      %p51 = scmp.eq.s32.totalorder %s50, 0
      %s53 = sadd.s32 %s52, 1
      %s54 = scalar_select %p51, %s52, %s53
      %p57 = pneg %p51
      %p58 = scmp.eq.s32.totalorder %s16, 1
      %p59 = por %p57, %p58
      %p60 = scmp.ne.s32.totalorder %s52, %s55
      %p61 = scmp.eq.s32.totalorder %s16, 0
      %p62 = por %p60, %p61
      %p63 = scmp.ne.s32.totalorder %s52, %s55
      %p64 = scmp.eq.s32.totalorder %s21, 1
      %p65 = por %p63, %p64
      %p66 = scmp.ne.s32.totalorder %s55, %s56
      %p67 = scmp.eq.s32.totalorder %s21, 0
      %p68 = por %p66, %p67
      %p69 = scmp.ne.s32.totalorder %s55, %s56
      %p70 = scmp.eq.s32.totalorder %s22, 1
      %p71 = por %p69, %p70
      %p73 = scmp.ne.s32.totalorder %s56, %s72
      %p74 = scmp.eq.s32.totalorder %s22, 0
      %p75 = por %p73, %p74
      %s76 = ssub.s32 %s16, %s23
      %p77 = scmp.eq.s32.totalorder %s76, 0
      %s79 = sadd.s32 %s78, 1
      %s80 = scalar_select %p77, %s78, %s79
      %p83 = pneg %p77
      %p84 = scmp.eq.s32.totalorder %s16, 1
      %p85 = por %p83, %p84
      %p86 = scmp.ne.s32.totalorder %s78, %s81
      %p87 = scmp.eq.s32.totalorder %s16, 0
      %p88 = por %p86, %p87
      %p89 = scmp.ne.s32.totalorder %s78, %s81
      %p90 = scmp.eq.s32.totalorder %s21, 1
      %p91 = por %p89, %p90
      %p92 = scmp.ne.s32.totalorder %s81, %s82
      %p93 = scmp.eq.s32.totalorder %s21, 0
      %p94 = por %p92, %p93
      %p95 = scmp.ne.s32.totalorder %s81, %s82
      %p96 = scmp.eq.s32.totalorder %s22, 1
      %p97 = por %p95, %p96
      %p99 = scmp.ne.s32.totalorder %s82, %s98
      %p100 = scmp.eq.s32.totalorder %s22, 0
      %p101 = por %p99, %p100
      %s102 = ssub.s32 %s16, %s23
      %p103 = scmp.eq.s32.totalorder %s102, 0
      %s105 = sadd.s32 %s104, 1
      %s106 = scalar_select %p103, %s104, %s105
      %p109 = pneg %p103
      %p110 = scmp.eq.s32.totalorder %s16, 1
      %p111 = por %p109, %p110
      %p112 = scmp.ne.s32.totalorder %s104, %s107
      %p113 = scmp.eq.s32.totalorder %s16, 0
      %p114 = por %p112, %p113
      %p115 = scmp.ne.s32.totalorder %s104, %s107
      %p116 = scmp.eq.s32.totalorder %s21, 1
      %p117 = por %p115, %p116
      %p118 = scmp.ne.s32.totalorder %s107, %s108
      %p119 = scmp.eq.s32.totalorder %s21, 0
      %p120 = por %p118, %p119
      %p121 = scmp.ne.s32.totalorder %s107, %s108
      %p122 = scmp.eq.s32.totalorder %s22, 1
      %p123 = por %p121, %p122
      %p125 = scmp.ne.s32.totalorder %s108, %s124
      %p126 = scmp.eq.s32.totalorder %s22, 0
      %p127 = por %p125, %p126
      %s128 = ssub.s32 %s16, %s23
      %p129 = scmp.eq.s32.totalorder %s128, 0
      %s131 = sadd.s32 %s130, 1
      %s132 = scalar_select %p129, %s130, %s131
      %p135 = pneg %p129
      %p136 = scmp.eq.s32.totalorder %s16, 1
      %p137 = por %p135, %p136
      %p138 = scmp.ne.s32.totalorder %s130, %s133
      %p139 = scmp.eq.s32.totalorder %s16, 0
      %p140 = por %p138, %p139
      %p141 = scmp.ne.s32.totalorder %s130, %s133
      %p142 = scmp.eq.s32.totalorder %s21, 1
      %p143 = por %p141, %p142
      %p144 = scmp.ne.s32.totalorder %s133, %s134
      %p145 = scmp.eq.s32.totalorder %s21, 0
      %p146 = por %p144, %p145
      %p147 = scmp.ne.s32.totalorder %s133, %s134
      %p148 = scmp.eq.s32.totalorder %s22, 1
      %p149 = por %p147, %p148
      %p151 = scmp.ne.s32.totalorder %s134, %s150
      %p152 = scmp.eq.s32.totalorder %s22, 0
      %p153 = por %p151, %p152
      %s154 = ssub.s32 %s16, %s23
      %p155 = scmp.eq.s32.totalorder %s154, 0
      %s157 = sadd.s32 %s156, 1
      %s158 = scalar_select %p155, %s156, %s157
      %p161 = pneg %p155
      %p162 = scmp.eq.s32.totalorder %s16, 1
      %p163 = por %p161, %p162
      %p164 = scmp.ne.s32.totalorder %s156, %s159
      %p165 = scmp.eq.s32.totalorder %s16, 0
      %p166 = por %p164, %p165
      %p167 = scmp.ne.s32.totalorder %s156, %s159
      %p168 = scmp.eq.s32.totalorder %s21, 1
      %p169 = por %p167, %p168
      %p170 = scmp.ne.s32.totalorder %s159, %s160
      %p171 = scmp.eq.s32.totalorder %s21, 0
      %p172 = por %p170, %p171
      %p173 = scmp.ne.s32.totalorder %s159, %s160
      %p174 = scmp.eq.s32.totalorder %s22, 1
      %p175 = por %p173, %p174
      %p177 = scmp.ne.s32.totalorder %s160, %s176
      %p178 = scmp.eq.s32.totalorder %s22, 0
      %p179 = por %p177, %p178
      %s180 = ssub.s32 %s16, %s23
      %p181 = scmp.eq.s32.totalorder %s180, 0
      %s183 = sadd.s32 %s182, 1
      %s184 = scalar_select %p181, %s182, %s183
      %p187 = pneg %p181
      %p188 = scmp.eq.s32.totalorder %s16, 1
      %p189 = por %p187, %p188
      %p190 = scmp.ne.s32.totalorder %s182, %s185
      %p191 = scmp.eq.s32.totalorder %s16, 0
      %p192 = por %p190, %p191
      %p193 = scmp.ne.s32.totalorder %s182, %s185
      %p194 = scmp.eq.s32.totalorder %s21, 1
      %p195 = por %p193, %p194
      %p196 = scmp.ne.s32.totalorder %s185, %s186
      %p197 = scmp.eq.s32.totalorder %s21, 0
      %p198 = por %p196, %p197
      %p199 = scmp.ne.s32.totalorder %s185, %s186
      %p200 = scmp.eq.s32.totalorder %s22, 1
      %p201 = por %p199, %p200
      %p203 = scmp.ne.s32.totalorder %s186, %s202
      %p204 = scmp.eq.s32.totalorder %s22, 0
      %p205 = por %p203, %p204
      %p206 = scmp.le.s32.totalorder 1, %s16
      %p207 = scmp.lt.s32.totalorder %s16, 3
      %p208 = pnand %p206, %p207
      %p209 = pneg %p208
      // Predicated region
      $region9: #{tpu_custom_call.1} parent=5 // pred_check
        _
      $region10: #{tpu_custom_call.1} parent=5 // pred_check_branch
        %211 = sbr.rel (%p208) target = $region12
      $region11: #{tpu_custom_call.1} parent=5 // pred_region
        %s212 = ssub.s32 %s16, 1
      $region12: #{tpu_custom_call.1} parent=5 // pred_fallthru
        _
      %p213 = scmp.lt.s32.totalorder %s16, 2
      // Predicated region
      $region13: #{tpu_custom_call.1} parent=5 // pred_check
        %p214 = pneg %p213
      $region14: #{tpu_custom_call.1} parent=5 // pred_check_branch
        %216 = sbr.rel (%p214) target = $region16
      $region15: #{tpu_custom_call.1} parent=5 // pred_region
        // Predicated region
        $region17: #{tpu_custom_call.1} parent=15 // pred_check
          %p217 = pneg %p36
        $region18: #{tpu_custom_call.1} parent=15 // pred_check_branch
          %219 = sbr.rel (%p217) target = $region20
        $region19: #{tpu_custom_call.1} parent=15 // pred_region
          %p220 = scmp.lt.s32.totalorder %s16, 1
          %s221 = scalar_select %p220, %s16, 1
          %s222 = smul.addr %s221, 32
          %s223 = smul.addr %s222, 8
          %s224 = scalar_lea.vmem %s0, %s223
        $region20: #{tpu_custom_call.1} parent=15 // pred_fallthru
          _
        // Predicated region
        $region21: #{tpu_custom_call.1} parent=15 // pred_check
          %p225 = pneg %p62
        $region22: #{tpu_custom_call.1} parent=15 // pred_check_branch
          %227 = sbr.rel (%p225) target = $region24
        $region23: #{tpu_custom_call.1} parent=15 // pred_region
          %p228 = scmp.lt.s32.totalorder %s16, 1
          %s229 = scalar_select %p228, %s16, 1
          %s230 = smul.addr %s229, 32
          %s231 = smul.addr %s230, 8
          %s232 = scalar_lea.vmem %s1, %s231
        $region24: #{tpu_custom_call.1} parent=15 // pred_fallthru
          _
        // Predicated region
        $region25: #{tpu_custom_call.1} parent=15 // pred_check
          %p233 = pneg %p88
        $region26: #{tpu_custom_call.1} parent=15 // pred_check_branch
          %235 = sbr.rel (%p233) target = $region28
        $region27: #{tpu_custom_call.1} parent=15 // pred_region
          %p236 = scmp.lt.s32.totalorder %s16, 1
          %s237 = scalar_select %p236, %s16, 1
          %s238 = smul.addr %s237, 32
          %s239 = smul.addr %s238, 8
          %s240 = scalar_lea.vmem %s2, %s239
        $region28: #{tpu_custom_call.1} parent=15 // pred_fallthru
          _
      $region16: #{tpu_custom_call.1} parent=5 // pred_fallthru
        _
      %p241 = scmp.le.s32.totalorder 1, %s16
      %p242 = scmp.lt.s32.totalorder %s16, 3
      %p243 = pnand %p241, %p242
      %p244 = pneg %p243
      // Predicated region
      $region29: #{tpu_custom_call.1} parent=5 // pred_check
        _
      $region30: #{tpu_custom_call.1} parent=5 // pred_check_branch
        %246 = sbr.rel (%p243) target = $region32
      $region31: #{tpu_custom_call.1} parent=5 // pred_region
        %s247 = ssub.s32 %s16, 1
        %p248 = scmp.lt.s32.totalorder %s21, 1
        %s249 = scalar_select %p248, %s21, 1
        %s250 = smul.addr %s249, 32
        %s251 = smul.addr %s250, 8
        %s252 = scalar_lea.vmem %s0, %s251
        %p253 = pneg %p42
        %p254 = pneg %p39
        %p255 = scmp.lt.s32.totalorder %s21, 1
        %s256 = scalar_select %p255, %s21, 1
        %s257 = smul.addr %s256, 32
        %s258 = smul.addr %s257, 8
        %s259 = scalar_lea.vmem %s1, %s258
        %p260 = pneg %p68
        %p261 = pneg %p65
        %p262 = scmp.lt.s32.totalorder %s21, 1
        %s263 = scalar_select %p262, %s21, 1
        %s264 = smul.addr %s263, 32
        %s265 = smul.addr %s264, 8
        %s266 = scalar_lea.vmem %s2, %s265
        %p267 = pneg %p94
        %p268 = pneg %p91
        %p269 = pneg %p120
        %p270 = pneg %p117
        %s271 = sand.u32 %s107, 1
        %s272 = scalar_lea.sflag [#allocation3], %s271
        %s273 = sand.u32 %s107, 1
        %s274 = smul.addr %s273, 512
        %s275 = scalar_lea.vmem [#allocation2], %s274
        %p276 = pneg %p146
        %p277 = pneg %p143
        %p278 = scmp.lt.s32.totalorder %s21, 1
        %s279 = scalar_select %p278, %s21, 1
        %s280 = scalar_lea.vmem %s4, %s279
        %p281 = pneg %p172
        %p282 = pneg %p169
        %p283 = scmp.lt.s32.totalorder %s21, 1
        %s284 = scalar_select %p283, %s21, 1
        %s285 = scalar_lea.vmem %s5, %s284
        %p286 = pneg %p198
        %p287 = pneg %p195
        %p288 = scmp.lt.s32.totalorder %s21, 1
        %s289 = scalar_select %p288, %s21, 1
        %s290 = scalar_lea.vmem %s6, %s289
        %p291 = scmp.lt.s32.totalorder %s21, 1
        %s292 = scalar_select %p291, %s21, 1
        %s293 = smul.addr %s292, 32
        %s294 = smul.addr %s293, 8
        %s295 = scalar_lea.vmem %s0, %s294
        %p296 = scmp.lt.s32.totalorder %s21, 1
        %s297 = scalar_select %p296, %s21, 1
        %s298 = smul.addr %s297, 32
        %s299 = smul.addr %s298, 8
        %s300 = scalar_lea.vmem %s1, %s299
        %p301 = scmp.lt.s32.totalorder %s21, 1
        %s302 = scalar_select %p301, %s21, 1
        %s303 = smul.addr %s302, 32
        %s304 = smul.addr %s303, 8
        %s305 = scalar_lea.vmem %s2, %s304
        %p306 = scmp.lt.s32.totalorder %s21, 1
        %s307 = scalar_select %p306, %s21, 1
        %s308 = scalar_lea.vmem %s4, %s307
        %p309 = scmp.lt.s32.totalorder %s21, 1
        %s310 = scalar_select %p309, %s21, 1
        %s311 = scalar_lea.vmem %s5, %s310
        %p312 = scmp.lt.s32.totalorder %s21, 1
        %s313 = scalar_select %p312, %s21, 1
        %s314 = scalar_lea.vmem %s6, %s313
        %v315 = vld [vmem:[%s295] sm:$0xff]
        %v316 = vld [vmem:[%s295 + $0x8] sm:$0xff]
        %v317 = vld [vmem:[%s295 + $0x10] sm:$0xff]
        %v318 = vld [vmem:[%s295 + $0x18] sm:$0xff]
        %v319 = vld [vmem:[%s295 + $0x20] sm:$0xff]
        %v320 = vld [vmem:[%s295 + $0x28] sm:$0xff]
        %v321 = vld [vmem:[%s295 + $0x30] sm:$0xff]
        %v322 = vld [vmem:[%s295 + $0x38] sm:$0xff]
        %v323 = vld [vmem:[%s295 + $0x40] sm:$0xff]
        %v324 = vld [vmem:[%s295 + $0x48] sm:$0xff]
        %v325 = vld [vmem:[%s295 + $0x50] sm:$0xff]
        %v326 = vld [vmem:[%s295 + $0x58] sm:$0xff]
        %v327 = vld [vmem:[%s295 + $0x60] sm:$0xff]
        %v328 = vld [vmem:[%s295 + $0x68] sm:$0xff]
        %v329 = vld [vmem:[%s295 + $0x70] sm:$0xff]
        %v330 = vld [vmem:[%s295 + $0x78] sm:$0xff]
        %v331 = vld [vmem:[%s295 + $0x80] sm:$0xff]
        %v332 = vld [vmem:[%s295 + $0x88] sm:$0xff]
        %v333 = vld [vmem:[%s295 + $0x90] sm:$0xff]
        %v334 = vld [vmem:[%s295 + $0x98] sm:$0xff]
        %v335 = vld [vmem:[%s295 + $0xa0] sm:$0xff]
        %v336 = vld [vmem:[%s295 + $0xa8] sm:$0xff]
        %v337 = vld [vmem:[%s295 + $0xb0] sm:$0xff]
        %v338 = vld [vmem:[%s295 + $0xb8] sm:$0xff]
        %v339 = vld [vmem:[%s295 + $0xc0] sm:$0xff]
        %v340 = vld [vmem:[%s295 + $0xc8] sm:$0xff]
        %v341 = vld [vmem:[%s295 + $0xd0] sm:$0xff]
        %v342 = vld [vmem:[%s295 + $0xd8] sm:$0xff]
        %v343 = vld [vmem:[%s295 + $0xe0] sm:$0xff]
        %v344 = vld [vmem:[%s295 + $0xe8] sm:$0xff]
        %v345 = vld [vmem:[%s295 + $0xf0] sm:$0xff]
        %v346 = vld [vmem:[%s295 + $0xf8] sm:$0xff]
        %v347 = vmul.f32 %v315, %v315
        %v348 = vmul.f32 %v316, %v316
        %v349 = vmul.f32 %v317, %v317
        %v350 = vmul.f32 %v318, %v318
        %v351 = vmul.f32 %v319, %v319
        %v352 = vmul.f32 %v320, %v320
        %v353 = vmul.f32 %v321, %v321
        %v354 = vmul.f32 %v322, %v322
        %v355 = vmul.f32 %v323, %v323
        %v356 = vmul.f32 %v324, %v324
        %v357 = vmul.f32 %v325, %v325
        %v358 = vmul.f32 %v326, %v326
        %v359 = vmul.f32 %v327, %v327
        %v360 = vmul.f32 %v328, %v328
        %v361 = vmul.f32 %v329, %v329
        %v362 = vmul.f32 %v330, %v330
        %v363 = vmul.f32 %v331, %v331
        %v364 = vmul.f32 %v332, %v332
        %v365 = vmul.f32 %v333, %v333
        %v366 = vmul.f32 %v334, %v334
        %v367 = vmul.f32 %v335, %v335
        %v368 = vmul.f32 %v336, %v336
        %v369 = vmul.f32 %v337, %v337
        %v370 = vmul.f32 %v338, %v338
        %v371 = vmul.f32 %v339, %v339
        %v372 = vmul.f32 %v340, %v340
        %v373 = vmul.f32 %v341, %v341
        %v374 = vmul.f32 %v342, %v342
        %v375 = vmul.f32 %v343, %v343
        %v376 = vmul.f32 %v344, %v344
        %v377 = vmul.f32 %v345, %v345
        %v378 = vmul.f32 %v346, %v346
        %vm379 = vcmask 261120
        %v380 = vsel %vm379, %v347, 0.0
        %381 = vadd.xlane.f32.xlu0 %v380
        %v382 = vpop.xlane.xlu0 %381
        %v383 = vsel %vm379, %v348, 0.0
        %384 = vadd.xlane.f32.xlu0 %v383
        %v385 = vpop.xlane.xlu0 %384
        %v386 = vsel %vm379, %v349, 0.0
        %387 = vadd.xlane.f32.xlu0 %v386
        %v388 = vpop.xlane.xlu0 %387
        %v389 = vsel %vm379, %v350, 0.0
        %390 = vadd.xlane.f32.xlu0 %v389
        %v391 = vpop.xlane.xlu0 %390
        %v392 = vsel %vm379, %v351, 0.0
        %393 = vadd.xlane.f32.xlu0 %v392
        %v394 = vpop.xlane.xlu0 %393
        %v395 = vsel %vm379, %v352, 0.0
        %396 = vadd.xlane.f32.xlu0 %v395
        %v397 = vpop.xlane.xlu0 %396
        %v398 = vsel %vm379, %v353, 0.0
        %399 = vadd.xlane.f32.xlu0 %v398
        %v400 = vpop.xlane.xlu0 %399
        %v401 = vsel %vm379, %v354, 0.0
        %402 = vadd.xlane.f32.xlu0 %v401
        %v403 = vpop.xlane.xlu0 %402
        %v404 = vsel %vm379, %v355, 0.0
        %405 = vadd.xlane.f32.xlu0 %v404
        %v406 = vpop.xlane.xlu0 %405
        %v407 = vsel %vm379, %v356, 0.0
        %408 = vadd.xlane.f32.xlu0 %v407
        %v409 = vpop.xlane.xlu0 %408
        %v410 = vsel %vm379, %v357, 0.0
        %411 = vadd.xlane.f32.xlu0 %v410
        %v412 = vpop.xlane.xlu0 %411
        %v413 = vsel %vm379, %v358, 0.0
        %414 = vadd.xlane.f32.xlu0 %v413
        %v415 = vpop.xlane.xlu0 %414
        %v416 = vsel %vm379, %v359, 0.0
        %417 = vadd.xlane.f32.xlu0 %v416
        %v418 = vpop.xlane.xlu0 %417
        %v419 = vsel %vm379, %v360, 0.0
        %420 = vadd.xlane.f32.xlu0 %v419
        %v421 = vpop.xlane.xlu0 %420
        %v422 = vsel %vm379, %v361, 0.0
        %423 = vadd.xlane.f32.xlu0 %v422
        %v424 = vpop.xlane.xlu0 %423
        %v425 = vsel %vm379, %v362, 0.0
        %426 = vadd.xlane.f32.xlu0 %v425
        %v427 = vpop.xlane.xlu0 %426
        %v428 = vsel %vm379, %v363, 0.0
        %429 = vadd.xlane.f32.xlu0 %v428
        %v430 = vpop.xlane.xlu0 %429
        %v431 = vsel %vm379, %v364, 0.0
        %432 = vadd.xlane.f32.xlu0 %v431
        %v433 = vpop.xlane.xlu0 %432
        %v434 = vsel %vm379, %v365, 0.0
        %435 = vadd.xlane.f32.xlu0 %v434
        %v436 = vpop.xlane.xlu0 %435
        %v437 = vsel %vm379, %v366, 0.0
        %438 = vadd.xlane.f32.xlu0 %v437
        %v439 = vpop.xlane.xlu0 %438
        %v440 = vsel %vm379, %v367, 0.0
        %441 = vadd.xlane.f32.xlu0 %v440
        %v442 = vpop.xlane.xlu0 %441
        %v443 = vsel %vm379, %v368, 0.0
        %444 = vadd.xlane.f32.xlu0 %v443
        %v445 = vpop.xlane.xlu0 %444
        %v446 = vsel %vm379, %v369, 0.0
        %447 = vadd.xlane.f32.xlu0 %v446
        %v448 = vpop.xlane.xlu0 %447
        %v449 = vsel %vm379, %v370, 0.0
        %450 = vadd.xlane.f32.xlu0 %v449
        %v451 = vpop.xlane.xlu0 %450
        %v452 = vsel %vm379, %v371, 0.0
        %453 = vadd.xlane.f32.xlu0 %v452
        %v454 = vpop.xlane.xlu0 %453
        %v455 = vsel %vm379, %v372, 0.0
        %456 = vadd.xlane.f32.xlu0 %v455
        %v457 = vpop.xlane.xlu0 %456
        %v458 = vsel %vm379, %v373, 0.0
        %459 = vadd.xlane.f32.xlu0 %v458
        %v460 = vpop.xlane.xlu0 %459
        %v461 = vsel %vm379, %v374, 0.0
        %462 = vadd.xlane.f32.xlu0 %v461
        %v463 = vpop.xlane.xlu0 %462
        %v464 = vsel %vm379, %v375, 0.0
        %465 = vadd.xlane.f32.xlu0 %v464
        %v466 = vpop.xlane.xlu0 %465
        %v467 = vsel %vm379, %v376, 0.0
        %468 = vadd.xlane.f32.xlu0 %v467
        %v469 = vpop.xlane.xlu0 %468
        %v470 = vsel %vm379, %v377, 0.0
        %471 = vadd.xlane.f32.xlu0 %v470
        %v472 = vpop.xlane.xlu0 %471
        %v473 = vsel %vm379, %v378, 0.0
        %474 = vadd.xlane.f32.xlu0 %v473
        %v475 = vpop.xlane.xlu0 %474
        %v476 = vmax.f32 %v382, 1e-20
        %v477 = vmax.f32 %v385, 1e-20
        %v478 = vmax.f32 %v388, 1e-20
        %v479 = vmax.f32 %v391, 1e-20
        %v480 = vmax.f32 %v394, 1e-20
        %v481 = vmax.f32 %v397, 1e-20
        %v482 = vmax.f32 %v400, 1e-20
        %v483 = vmax.f32 %v403, 1e-20
        %v484 = vmax.f32 %v406, 1e-20
        %v485 = vmax.f32 %v409, 1e-20
        %v486 = vmax.f32 %v412, 1e-20
        %v487 = vmax.f32 %v415, 1e-20
        %v488 = vmax.f32 %v418, 1e-20
        %v489 = vmax.f32 %v421, 1e-20
        %v490 = vmax.f32 %v424, 1e-20
        %v491 = vmax.f32 %v427, 1e-20
        %v492 = vmax.f32 %v430, 1e-20
        %v493 = vmax.f32 %v433, 1e-20
        %v494 = vmax.f32 %v436, 1e-20
        %v495 = vmax.f32 %v439, 1e-20
        %v496 = vmax.f32 %v442, 1e-20
        %v497 = vmax.f32 %v445, 1e-20
        %v498 = vmax.f32 %v448, 1e-20
        %v499 = vmax.f32 %v451, 1e-20
        %v500 = vmax.f32 %v454, 1e-20
        %v501 = vmax.f32 %v457, 1e-20
        %v502 = vmax.f32 %v460, 1e-20
        %v503 = vmax.f32 %v463, 1e-20
        %v504 = vmax.f32 %v466, 1e-20
        %v505 = vmax.f32 %v469, 1e-20
        %v506 = vmax.f32 %v472, 1e-20
        %v507 = vmax.f32 %v475, 1e-20
        %v508 = vrsqrt.pop %v476
        %v509 = vrsqrt.pop %v477
        %v510 = vrsqrt.pop %v478
        %v511 = vrsqrt.pop %v479
        %v512 = vrsqrt.pop %v480
        %v513 = vrsqrt.pop %v481
        %v514 = vrsqrt.pop %v482
        %v515 = vrsqrt.pop %v483
        %v516 = vrsqrt.pop %v484
        %v517 = vrsqrt.pop %v485
        %v518 = vrsqrt.pop %v486
        %v519 = vrsqrt.pop %v487
        %v520 = vrsqrt.pop %v488
        %v521 = vrsqrt.pop %v489
        %v522 = vrsqrt.pop %v490
        %v523 = vrsqrt.pop %v491
        %v524 = vrsqrt.pop %v492
        %v525 = vrsqrt.pop %v493
        %v526 = vrsqrt.pop %v494
        %v527 = vrsqrt.pop %v495
        %v528 = vrsqrt.pop %v496
        %v529 = vrsqrt.pop %v497
        %v530 = vrsqrt.pop %v498
        %v531 = vrsqrt.pop %v499
        %v532 = vrsqrt.pop %v500
        %v533 = vrsqrt.pop %v501
        %v534 = vrsqrt.pop %v502
        %v535 = vrsqrt.pop %v503
        %v536 = vrsqrt.pop %v504
        %v537 = vrsqrt.pop %v505
        %v538 = vrsqrt.pop %v506
        %v539 = vrsqrt.pop %v507
        %v540 = vmul.f32 %v315, %v508
        %v541 = vmul.f32 %v316, %v509
        %v542 = vmul.f32 %v317, %v510
        %v543 = vmul.f32 %v318, %v511
        %v544 = vmul.f32 %v319, %v512
        %v545 = vmul.f32 %v320, %v513
        %v546 = vmul.f32 %v321, %v514
        %v547 = vmul.f32 %v322, %v515
        %v548 = vmul.f32 %v323, %v516
        %v549 = vmul.f32 %v324, %v517
        %v550 = vmul.f32 %v325, %v518
        %v551 = vmul.f32 %v326, %v519
        %v552 = vmul.f32 %v327, %v520
        %v553 = vmul.f32 %v328, %v521
        %v554 = vmul.f32 %v329, %v522
        %v555 = vmul.f32 %v330, %v523
        %v556 = vmul.f32 %v331, %v524
        %v557 = vmul.f32 %v332, %v525
        %v558 = vmul.f32 %v333, %v526
        %v559 = vmul.f32 %v334, %v527
        %v560 = vmul.f32 %v335, %v528
        %v561 = vmul.f32 %v336, %v529
        %v562 = vmul.f32 %v337, %v530
        %v563 = vmul.f32 %v338, %v531
        %v564 = vmul.f32 %v339, %v532
        %v565 = vmul.f32 %v340, %v533
        %v566 = vmul.f32 %v341, %v534
        %v567 = vmul.f32 %v342, %v535
        %v568 = vmul.f32 %v343, %v536
        %v569 = vmul.f32 %v344, %v537
        %v570 = vmul.f32 %v345, %v538
        %v571 = vmul.f32 %v346, %v539
        %v572 = vld [vmem:[%s300] sm:$0xff]
        %v573 = vld [vmem:[%s300 + $0x8] sm:$0xff]
        %v574 = vld [vmem:[%s300 + $0x10] sm:$0xff]
        %v575 = vld [vmem:[%s300 + $0x18] sm:$0xff]
        %v576 = vld [vmem:[%s300 + $0x20] sm:$0xff]
        %v577 = vld [vmem:[%s300 + $0x28] sm:$0xff]
        %v578 = vld [vmem:[%s300 + $0x30] sm:$0xff]
        %v579 = vld [vmem:[%s300 + $0x38] sm:$0xff]
        %v580 = vld [vmem:[%s300 + $0x40] sm:$0xff]
        %v581 = vld [vmem:[%s300 + $0x48] sm:$0xff]
        %v582 = vld [vmem:[%s300 + $0x50] sm:$0xff]
        %v583 = vld [vmem:[%s300 + $0x58] sm:$0xff]
        %v584 = vld [vmem:[%s300 + $0x60] sm:$0xff]
        %v585 = vld [vmem:[%s300 + $0x68] sm:$0xff]
        %v586 = vld [vmem:[%s300 + $0x70] sm:$0xff]
        %v587 = vld [vmem:[%s300 + $0x78] sm:$0xff]
        %v588 = vld [vmem:[%s300 + $0x80] sm:$0xff]
        %v589 = vld [vmem:[%s300 + $0x88] sm:$0xff]
        %v590 = vld [vmem:[%s300 + $0x90] sm:$0xff]
        %v591 = vld [vmem:[%s300 + $0x98] sm:$0xff]
        %v592 = vld [vmem:[%s300 + $0xa0] sm:$0xff]
        %v593 = vld [vmem:[%s300 + $0xa8] sm:$0xff]
        %v594 = vld [vmem:[%s300 + $0xb0] sm:$0xff]
        %v595 = vld [vmem:[%s300 + $0xb8] sm:$0xff]
        %v596 = vld [vmem:[%s300 + $0xc0] sm:$0xff]
        %v597 = vld [vmem:[%s300 + $0xc8] sm:$0xff]
        %v598 = vld [vmem:[%s300 + $0xd0] sm:$0xff]
        %v599 = vld [vmem:[%s300 + $0xd8] sm:$0xff]
        %v600 = vld [vmem:[%s300 + $0xe0] sm:$0xff]
        %v601 = vld [vmem:[%s300 + $0xe8] sm:$0xff]
        %v602 = vld [vmem:[%s300 + $0xf0] sm:$0xff]
        %v603 = vld [vmem:[%s300 + $0xf8] sm:$0xff]
        %v604 = vmul.f32 %v572, %v572
        %v605 = vmul.f32 %v573, %v573
        %v606 = vmul.f32 %v574, %v574
        %v607 = vmul.f32 %v575, %v575
        %v608 = vmul.f32 %v576, %v576
        %v609 = vmul.f32 %v577, %v577
        %v610 = vmul.f32 %v578, %v578
        %v611 = vmul.f32 %v579, %v579
        %v612 = vmul.f32 %v580, %v580
        %v613 = vmul.f32 %v581, %v581
        %v614 = vmul.f32 %v582, %v582
        %v615 = vmul.f32 %v583, %v583
        %v616 = vmul.f32 %v584, %v584
        %v617 = vmul.f32 %v585, %v585
        %v618 = vmul.f32 %v586, %v586
        %v619 = vmul.f32 %v587, %v587
        %v620 = vmul.f32 %v588, %v588
        %v621 = vmul.f32 %v589, %v589
        %v622 = vmul.f32 %v590, %v590
        %v623 = vmul.f32 %v591, %v591
        %v624 = vmul.f32 %v592, %v592
        %v625 = vmul.f32 %v593, %v593
        %v626 = vmul.f32 %v594, %v594
        %v627 = vmul.f32 %v595, %v595
        %v628 = vmul.f32 %v596, %v596
        %v629 = vmul.f32 %v597, %v597
        %v630 = vmul.f32 %v598, %v598
        %v631 = vmul.f32 %v599, %v599
        %v632 = vmul.f32 %v600, %v600
        %v633 = vmul.f32 %v601, %v601
        %v634 = vmul.f32 %v602, %v602
        %v635 = vmul.f32 %v603, %v603
        %vm636 = vcmask 130048
        %v637 = vsel %vm636, %v604, 0.0
        %638 = vadd.xlane.f32.xlu0 %v637
        %v639 = vpop.xlane.xlu0 %638
        %v640 = vsel %vm636, %v605, 0.0
        %641 = vadd.xlane.f32.xlu0 %v640
        %v642 = vpop.xlane.xlu0 %641
        %v643 = vsel %vm636, %v606, 0.0
        %644 = vadd.xlane.f32.xlu0 %v643
        %v645 = vpop.xlane.xlu0 %644
        %v646 = vsel %vm636, %v607, 0.0
        %647 = vadd.xlane.f32.xlu0 %v646
        %v648 = vpop.xlane.xlu0 %647
        %v649 = vsel %vm636, %v608, 0.0
        %650 = vadd.xlane.f32.xlu0 %v649
        %v651 = vpop.xlane.xlu0 %650
        %v652 = vsel %vm636, %v609, 0.0
        %653 = vadd.xlane.f32.xlu0 %v652
        %v654 = vpop.xlane.xlu0 %653
        %v655 = vsel %vm636, %v610, 0.0
        %656 = vadd.xlane.f32.xlu0 %v655
        %v657 = vpop.xlane.xlu0 %656
        %v658 = vsel %vm636, %v611, 0.0
        %659 = vadd.xlane.f32.xlu0 %v658
        %v660 = vpop.xlane.xlu0 %659
        %v661 = vsel %vm636, %v612, 0.0
        %662 = vadd.xlane.f32.xlu0 %v661
        %v663 = vpop.xlane.xlu0 %662
        %v664 = vsel %vm636, %v613, 0.0
        %665 = vadd.xlane.f32.xlu0 %v664
        %v666 = vpop.xlane.xlu0 %665
        %v667 = vsel %vm636, %v614, 0.0
        %668 = vadd.xlane.f32.xlu0 %v667
        %v669 = vpop.xlane.xlu0 %668
        %v670 = vsel %vm636, %v615, 0.0
        %671 = vadd.xlane.f32.xlu0 %v670
        %v672 = vpop.xlane.xlu0 %671
        %v673 = vsel %vm636, %v616, 0.0
        %674 = vadd.xlane.f32.xlu0 %v673
        %v675 = vpop.xlane.xlu0 %674
        %v676 = vsel %vm636, %v617, 0.0
        %677 = vadd.xlane.f32.xlu0 %v676
        %v678 = vpop.xlane.xlu0 %677
        %v679 = vsel %vm636, %v618, 0.0
        %680 = vadd.xlane.f32.xlu0 %v679
        %v681 = vpop.xlane.xlu0 %680
        %v682 = vsel %vm636, %v619, 0.0
        %683 = vadd.xlane.f32.xlu0 %v682
        %v684 = vpop.xlane.xlu0 %683
        %v685 = vsel %vm636, %v620, 0.0
        %686 = vadd.xlane.f32.xlu0 %v685
        %v687 = vpop.xlane.xlu0 %686
        %v688 = vsel %vm636, %v621, 0.0
        %689 = vadd.xlane.f32.xlu0 %v688
        %v690 = vpop.xlane.xlu0 %689
        %v691 = vsel %vm636, %v622, 0.0
        %692 = vadd.xlane.f32.xlu0 %v691
        %v693 = vpop.xlane.xlu0 %692
        %v694 = vsel %vm636, %v623, 0.0
        %695 = vadd.xlane.f32.xlu0 %v694
        %v696 = vpop.xlane.xlu0 %695
        %v697 = vsel %vm636, %v624, 0.0
        %698 = vadd.xlane.f32.xlu0 %v697
        %v699 = vpop.xlane.xlu0 %698
        %v700 = vsel %vm636, %v625, 0.0
        %701 = vadd.xlane.f32.xlu0 %v700
        %v702 = vpop.xlane.xlu0 %701
        %v703 = vsel %vm636, %v626, 0.0
        %704 = vadd.xlane.f32.xlu0 %v703
        %v705 = vpop.xlane.xlu0 %704
        %v706 = vsel %vm636, %v627, 0.0
        %707 = vadd.xlane.f32.xlu0 %v706
        %v708 = vpop.xlane.xlu0 %707
        %v709 = vsel %vm636, %v628, 0.0
        %710 = vadd.xlane.f32.xlu0 %v709
        %v711 = vpop.xlane.xlu0 %710
        %v712 = vsel %vm636, %v629, 0.0
        %713 = vadd.xlane.f32.xlu0 %v712
        %v714 = vpop.xlane.xlu0 %713
        %v715 = vsel %vm636, %v630, 0.0
        %716 = vadd.xlane.f32.xlu0 %v715
        %v717 = vpop.xlane.xlu0 %716
        %v718 = vsel %vm636, %v631, 0.0
        %719 = vadd.xlane.f32.xlu0 %v718
        %v720 = vpop.xlane.xlu0 %719
        %v721 = vsel %vm636, %v632, 0.0
        %722 = vadd.xlane.f32.xlu0 %v721
        %v723 = vpop.xlane.xlu0 %722
        %v724 = vsel %vm636, %v633, 0.0
        %725 = vadd.xlane.f32.xlu0 %v724
        %v726 = vpop.xlane.xlu0 %725
        %v727 = vsel %vm636, %v634, 0.0
        %728 = vadd.xlane.f32.xlu0 %v727
        %v729 = vpop.xlane.xlu0 %728
        %v730 = vsel %vm636, %v635, 0.0
        %731 = vadd.xlane.f32.xlu0 %v730
        %v732 = vpop.xlane.xlu0 %731
        %v733 = vmax.f32 %v639, 1e-20
        %v734 = vmax.f32 %v642, 1e-20
        %v735 = vmax.f32 %v645, 1e-20
        %v736 = vmax.f32 %v648, 1e-20
        %v737 = vmax.f32 %v651, 1e-20
        %v738 = vmax.f32 %v654, 1e-20
        %v739 = vmax.f32 %v657, 1e-20
        %v740 = vmax.f32 %v660, 1e-20
        %v741 = vmax.f32 %v663, 1e-20
        %v742 = vmax.f32 %v666, 1e-20
        %v743 = vmax.f32 %v669, 1e-20
        %v744 = vmax.f32 %v672, 1e-20
        %v745 = vmax.f32 %v675, 1e-20
        %v746 = vmax.f32 %v678, 1e-20
        %v747 = vmax.f32 %v681, 1e-20
        %v748 = vmax.f32 %v684, 1e-20
        %v749 = vmax.f32 %v687, 1e-20
        %v750 = vmax.f32 %v690, 1e-20
        %v751 = vmax.f32 %v693, 1e-20
        %v752 = vmax.f32 %v696, 1e-20
        %v753 = vmax.f32 %v699, 1e-20
        %v754 = vmax.f32 %v702, 1e-20
        %v755 = vmax.f32 %v705, 1e-20
        %v756 = vmax.f32 %v708, 1e-20
        %v757 = vmax.f32 %v711, 1e-20
        %v758 = vmax.f32 %v714, 1e-20
        %v759 = vmax.f32 %v717, 1e-20
        %v760 = vmax.f32 %v720, 1e-20
        %v761 = vmax.f32 %v723, 1e-20
        %v762 = vmax.f32 %v726, 1e-20
        %v763 = vmax.f32 %v729, 1e-20
        %v764 = vmax.f32 %v732, 1e-20
        %v765 = vrsqrt.pop %v733
        %v766 = vrsqrt.pop %v734
        %v767 = vrsqrt.pop %v735
        %v768 = vrsqrt.pop %v736
        %v769 = vrsqrt.pop %v737
        %v770 = vrsqrt.pop %v738
        %v771 = vrsqrt.pop %v739
        %v772 = vrsqrt.pop %v740
        %v773 = vrsqrt.pop %v741
        %v774 = vrsqrt.pop %v742
        %v775 = vrsqrt.pop %v743
        %v776 = vrsqrt.pop %v744
        %v777 = vrsqrt.pop %v745
        %v778 = vrsqrt.pop %v746
        %v779 = vrsqrt.pop %v747
        %v780 = vrsqrt.pop %v748
        %v781 = vrsqrt.pop %v749
        %v782 = vrsqrt.pop %v750
        %v783 = vrsqrt.pop %v751
        %v784 = vrsqrt.pop %v752
        %v785 = vrsqrt.pop %v753
        %v786 = vrsqrt.pop %v754
        %v787 = vrsqrt.pop %v755
        %v788 = vrsqrt.pop %v756
        %v789 = vrsqrt.pop %v757
        %v790 = vrsqrt.pop %v758
        %v791 = vrsqrt.pop %v759
        %v792 = vrsqrt.pop %v760
        %v793 = vrsqrt.pop %v761
        %v794 = vrsqrt.pop %v762
        %v795 = vrsqrt.pop %v763
        %v796 = vrsqrt.pop %v764
        %v797 = vmul.f32 %v572, %v765
        %v798 = vmul.f32 %v573, %v766
        %v799 = vmul.f32 %v574, %v767
        %v800 = vmul.f32 %v575, %v768
        %v801 = vmul.f32 %v576, %v769
        %v802 = vmul.f32 %v577, %v770
        %v803 = vmul.f32 %v578, %v771
        %v804 = vmul.f32 %v579, %v772
        %v805 = vmul.f32 %v580, %v773
        %v806 = vmul.f32 %v581, %v774
        %v807 = vmul.f32 %v582, %v775
        %v808 = vmul.f32 %v583, %v776
        %v809 = vmul.f32 %v584, %v777
        %v810 = vmul.f32 %v585, %v778
        %v811 = vmul.f32 %v586, %v779
        %v812 = vmul.f32 %v587, %v780
        %v813 = vmul.f32 %v588, %v781
        %v814 = vmul.f32 %v589, %v782
        %v815 = vmul.f32 %v590, %v783
        %v816 = vmul.f32 %v591, %v784
        %v817 = vmul.f32 %v592, %v785
        %v818 = vmul.f32 %v593, %v786
        %v819 = vmul.f32 %v594, %v787
        %v820 = vmul.f32 %v595, %v788
        %v821 = vmul.f32 %v596, %v789
        %v822 = vmul.f32 %v597, %v790
        %v823 = vmul.f32 %v598, %v791
        %v824 = vmul.f32 %v599, %v792
        %v825 = vmul.f32 %v600, %v793
        %v826 = vmul.f32 %v601, %v794
        %v827 = vmul.f32 %v602, %v795
        %v828 = vmul.f32 %v603, %v796
        %v830 = vsel %vm379, %v540, 0
        %v833 = vsel %vm379, %v541, 0
        %v836 = vsel %vm379, %v542, 0
        %v839 = vsel %vm379, %v543, 0
        %v842 = vsel %vm379, %v544, 0
        %v845 = vsel %vm379, %v545, 0
        %v848 = vsel %vm379, %v546, 0
        %v851 = vsel %vm379, %v547, 0
        %v854 = vsel %vm379, %v548, 0
        %v857 = vsel %vm379, %v549, 0
        %v860 = vsel %vm379, %v550, 0
        %v863 = vsel %vm379, %v551, 0
        %v866 = vsel %vm379, %v552, 0
        %v869 = vsel %vm379, %v553, 0
        %v872 = vsel %vm379, %v554, 0
        %v875 = vsel %vm379, %v555, 0
        %v878 = vsel %vm379, %v556, 0
        %v881 = vsel %vm379, %v557, 0
        %v884 = vsel %vm379, %v558, 0
        %v887 = vsel %vm379, %v559, 0
        %v890 = vsel %vm379, %v560, 0
        %v893 = vsel %vm379, %v561, 0
        %v896 = vsel %vm379, %v562, 0
        %v899 = vsel %vm379, %v563, 0
        %v902 = vsel %vm379, %v564, 0
        %v905 = vsel %vm379, %v565, 0
        %v908 = vsel %vm379, %v566, 0
        %v911 = vsel %vm379, %v567, 0
        %v914 = vsel %vm379, %v568, 0
        %v917 = vsel %vm379, %v569, 0
        %v920 = vsel %vm379, %v570, 0
        %v923 = vsel %vm379, %v571, 0
        %925 = vmatprep.subr.mxu0 0.0
        %926 = vmatpush1.xpose.msra.mxu0 %v830
        %927 = vmatprep.subr.mxu0 0.0
        %928 = vmatpush1.xpose.msra.mxu0 %v833
        %929 = vmatprep.subr.mxu0 0.0
        %930 = vmatpush1.xpose.msra.mxu0 %v836
        %931 = vmatprep.subr.mxu0 0.0
        %932 = vmatpush1.xpose.msra.mxu0 %v839
        %933 = vmatprep.subr.mxu0 0.0
        %934 = vmatpush1.xpose.msra.mxu0 %v842
        %935 = vmatprep.subr.mxu0 0.0
        %936 = vmatpush1.xpose.msra.mxu0 %v845
        %937 = vmatprep.subr.mxu0 0.0
        %938 = vmatpush1.xpose.msra.mxu0 %v848
        %939 = vmatprep.subr.mxu0 0.0
        %940 = vmatpush1.xpose.msra.mxu0 %v851
        %941 = vmatprep.subr.mxu0 0.0
        %942 = vmatpush1.xpose.msra.mxu0 %v854
        %943 = vmatprep.subr.mxu0 0.0
        %944 = vmatpush1.xpose.msra.mxu0 %v857
        %945 = vmatprep.subr.mxu0 0.0
        %946 = vmatpush1.xpose.msra.mxu0 %v860
        %947 = vmatprep.subr.mxu0 0.0
        %948 = vmatpush1.xpose.msra.mxu0 %v863
        %949 = vmatprep.subr.mxu0 0.0
        %950 = vmatpush1.xpose.msra.mxu0 %v866
        %951 = vmatprep.subr.mxu0 0.0
        %952 = vmatpush1.xpose.msra.mxu0 %v869
        %953 = vmatprep.subr.mxu0 0.0
        %954 = vmatpush1.xpose.msra.mxu0 %v872
        %955 = vmatprep.subr.mxu0 0.0
        %956 = vmatpush1.xpose.msra.mxu0 %v875
        %957 = vmatprep.subr.mxu0 0.0
        %958 = vmatpush1.xpose.msra.mxu0 %v878
        %959 = vmatprep.subr.mxu0 0.0
        %960 = vmatpush1.xpose.msra.mxu0 %v881
        %961 = vmatprep.subr.mxu0 0.0
        %962 = vmatpush1.xpose.msra.mxu0 %v884
        %963 = vmatprep.subr.mxu0 0.0
        %964 = vmatpush1.xpose.msra.mxu0 %v887
        %965 = vmatprep.subr.mxu0 0.0
        %966 = vmatpush1.xpose.msra.mxu0 %v890
        %967 = vmatprep.subr.mxu0 0.0
        %968 = vmatpush1.xpose.msra.mxu0 %v893
        %969 = vmatprep.subr.mxu0 0.0
        %970 = vmatpush1.xpose.msra.mxu0 %v896
        %971 = vmatprep.subr.mxu0 0.0
        %972 = vmatpush1.xpose.msra.mxu0 %v899
        %973 = vmatprep.subr.mxu0 0.0
        %974 = vmatpush1.xpose.msra.mxu0 %v902
        %975 = vmatprep.subr.mxu0 0.0
        %976 = vmatpush1.xpose.msra.mxu0 %v905
        %977 = vmatprep.subr.mxu0 0.0
        %978 = vmatpush1.xpose.msra.mxu0 %v908
        %979 = vmatprep.subr.mxu0 0.0
        %980 = vmatpush1.xpose.msra.mxu0 %v911
        %981 = vmatprep.subr.mxu0 0.0
        %982 = vmatpush1.xpose.msra.mxu0 %v914
        %983 = vmatprep.subr.mxu0 0.0
        %984 = vmatpush1.xpose.msra.mxu0 %v917
        %985 = vmatprep.subr.mxu0 0.0
        %986 = vmatpush1.xpose.msra.mxu0 %v920
        %987 = vmatprep.subr.mxu0 0.0
        %988 = vmatpush1.xpose.msra.mxu0 %v923
        %989 = vmatprep.mubr.f32.mxu0 0.0
        %990 = vmatmul.mubr.f32.gmra.mrb[0].mxu0 %v830
        %v991 = vpop.f32.mrb[0].mxu0
        %v992 = vadd.f32 0.0, %v991
        %v993 = vpop.f32.mrb[0].mxu0
        %v994 = vadd.f32 0.0, %v993
        %995 = vmatprep.mubr.f32.mxu0 0.0
        %996 = vmatmul.mubr.f32.gmra.mrb[0].mxu0 %v833
        %v997 = vpop.f32.mrb[0].mxu0
        %v998 = vadd.f32 0.0, %v997
        %v999 = vpop.f32.mrb[0].mxu0
        %v1000 = vadd.f32 0.0, %v999
        %1001 = vmatprep.mubr.f32.mxu0 0.0
        %1002 = vmatmul.mubr.f32.gmra.mrb[0].mxu0 %v836
        %v1003 = vpop.f32.mrb[0].mxu0
        %v1004 = vadd.f32 0.0, %v1003
        %v1005 = vpop.f32.mrb[0].mxu0
        %v1006 = vadd.f32 0.0, %v1005
        %1007 = vmatprep.mubr.f32.mxu0 0.0
        %1008 = vmatmul.mubr.f32.gmra.mrb[0].mxu0 %v839
        %v1009 = vpop.f32.mrb[0].mxu0
        %v1010 = vadd.f32 0.0, %v1009
        %v1011 = vpop.f32.mrb[0].mxu0
        %v1012 = vadd.f32 0.0, %v1011
        %1013 = vmatprep.mubr.f32.mxu0 0.0
        %1014 = vmatmul.mubr.f32.gmra.mrb[0].mxu0 %v842
        %v1015 = vpop.f32.mrb[0].mxu0
        %v1016 = vadd.f32 0.0, %v1015
        %v1017 = vpop.f32.mrb[0].mxu0
        %v1018 = vadd.f32 0.0, %v1017
        %1019 = vmatprep.mubr.f32.mxu0 0.0
        %1020 = vmatmul.mubr.f32.gmra.mrb[0].mxu0 %v845
        %v1021 = vpop.f32.mrb[0].mxu0
        %v1022 = vadd.f32 0.0, %v1021
        %v1023 = vpop.f32.mrb[0].mxu0
        %v1024 = vadd.f32 0.0, %v1023
        %1025 = vmatprep.mubr.f32.mxu0 0.0
        %1026 = vmatmul.mubr.f32.gmra.mrb[0].mxu0 %v848
        %v1027 = vpop.f32.mrb[0].mxu0
        %v1028 = vadd.f32 0.0, %v1027
        %v1029 = vpop.f32.mrb[0].mxu0
        %v1030 = vadd.f32 0.0, %v1029
        %1031 = vmatprep.mubr.f32.mxu0 0.0
        %1032 = vmatmul.mubr.f32.gmra.mrb[0].mxu0 %v851
        %v1033 = vpop.f32.mrb[0].mxu0
        %v1034 = vadd.f32 0.0, %v1033
        %v1035 = vpop.f32.mrb[0].mxu0
        %v1036 = vadd.f32 0.0, %v1035
        %1037 = vmatprep.mubr.f32.mxu0 0.0
        %1038 = vmatmul.mubr.f32.gmra.mrb[0].mxu0 %v854
        %v1039 = vpop.f32.mrb[0].mxu0
        %v1040 = vadd.f32 0.0, %v1039
        %v1041 = vpop.f32.mrb[0].mxu0
        %v1042 = vadd.f32 0.0, %v1041
        %1043 = vmatprep.mubr.f32.mxu0 0.0
        %1044 = vmatmul.mubr.f32.gmra.mrb[0].mxu0 %v857
        %v1045 = vpop.f32.mrb[0].mxu0
        %v1046 = vadd.f32 0.0, %v1045
        %v1047 = vpop.f32.mrb[0].mxu0
        %v1048 = vadd.f32 0.0, %v1047
        %1049 = vmatprep.mubr.f32.mxu0 0.0
        %1050 = vmatmul.mubr.f32.gmra.mrb[0].mxu0 %v860
        %v1051 = vpop.f32.mrb[0].mxu0
        %v1052 = vadd.f32 0.0, %v1051
        %v1053 = vpop.f32.mrb[0].mxu0
        %v1054 = vadd.f32 0.0, %v1053
        %1055 = vmatprep.mubr.f32.mxu0 0.0
        %1056 = vmatmul.mubr.f32.gmra.mrb[0].mxu0 %v863
        %v1057 = vpop.f32.mrb[0].mxu0
        %v1058 = vadd.f32 0.0, %v1057
        %v1059 = vpop.f32.mrb[0].mxu0
        %v1060 = vadd.f32 0.0, %v1059
        %1061 = vmatprep.mubr.f32.mxu0 0.0
        %1062 = vmatmul.mubr.f32.gmra.mrb[0].mxu0 %v866
        %v1063 = vpop.f32.mrb[0].mxu0
        %v1064 = vadd.f32 0.0, %v1063
        %v1065 = vpop.f32.mrb[0].mxu0
        %v1066 = vadd.f32 0.0, %v1065
        %1067 = vmatprep.mubr.f32.mxu0 0.0
        %1068 = vmatmul.mubr.f32.gmra.mrb[0].mxu0 %v869
        %v1069 = vpop.f32.mrb[0].mxu0
        %v1070 = vadd.f32 0.0, %v1069
        %v1071 = vpop.f32.mrb[0].mxu0
        %v1072 = vadd.f32 0.0, %v1071
        %1073 = vmatprep.mubr.f32.mxu0 0.0
        %1074 = vmatmul.mubr.f32.gmra.mrb[0].mxu0 %v872
        %v1075 = vpop.f32.mrb[0].mxu0
        %v1076 = vadd.f32 0.0, %v1075
        %v1077 = vpop.f32.mrb[0].mxu0
        %v1078 = vadd.f32 0.0, %v1077
        %1079 = vmatprep.mubr.f32.mxu0 0.0
        %1080 = vmatmul.mubr.f32.gmra.mrb[0].mxu0 %v875
        %v1081 = vpop.f32.mrb[0].mxu0
        %v1082 = vadd.f32 0.0, %v1081
        %v1083 = vpop.f32.mrb[0].mxu0
        %v1084 = vadd.f32 0.0, %v1083
        %1085 = vmatprep.mubr.f32.mxu0 0.0
        %1086 = vmatmul.mubr.f32.gmra.mrb[0].mxu0 %v878
        %v1087 = vpop.f32.mrb[0].mxu0
        %v1088 = vadd.f32 0.0, %v1087
        %v1089 = vpop.f32.mrb[0].mxu0
        %v1090 = vadd.f32 0.0, %v1089
        %1091 = vmatprep.mubr.f32.mxu0 0.0
        %1092 = vmatmul.mubr.f32.gmra.mrb[0].mxu0 %v881
        %v1093 = vpop.f32.mrb[0].mxu0
        %v1094 = vadd.f32 0.0, %v1093
        %v1095 = vpop.f32.mrb[0].mxu0
        %v1096 = vadd.f32 0.0, %v1095
        %1097 = vmatprep.mubr.f32.mxu0 0.0
        %1098 = vmatmul.mubr.f32.gmra.mrb[0].mxu0 %v884
        %v1099 = vpop.f32.mrb[0].mxu0
        %v1100 = vadd.f32 0.0, %v1099
        %v1101 = vpop.f32.mrb[0].mxu0
        %v1102 = vadd.f32 0.0, %v1101
        %1103 = vmatprep.mubr.f32.mxu0 0.0
        %1104 = vmatmul.mubr.f32.gmra.mrb[0].mxu0 %v887
        %v1105 = vpop.f32.mrb[0].mxu0
        %v1106 = vadd.f32 0.0, %v1105
        %v1107 = vpop.f32.mrb[0].mxu0
        %v1108 = vadd.f32 0.0, %v1107
        %1109 = vmatprep.mubr.f32.mxu0 0.0
        %1110 = vmatmul.mubr.f32.gmra.mrb[0].mxu0 %v890
        %v1111 = vpop.f32.mrb[0].mxu0
        %v1112 = vadd.f32 0.0, %v1111
        %v1113 = vpop.f32.mrb[0].mxu0
        %v1114 = vadd.f32 0.0, %v1113
        %1115 = vmatprep.mubr.f32.mxu0 0.0
        %1116 = vmatmul.mubr.f32.gmra.mrb[0].mxu0 %v893
        %v1117 = vpop.f32.mrb[0].mxu0
        %v1118 = vadd.f32 0.0, %v1117
        %v1119 = vpop.f32.mrb[0].mxu0
        %v1120 = vadd.f32 0.0, %v1119
        %1121 = vmatprep.mubr.f32.mxu0 0.0
        %1122 = vmatmul.mubr.f32.gmra.mrb[0].mxu0 %v896
        %v1123 = vpop.f32.mrb[0].mxu0
        %v1124 = vadd.f32 0.0, %v1123
        %v1125 = vpop.f32.mrb[0].mxu0
        %v1126 = vadd.f32 0.0, %v1125
        %1127 = vmatprep.mubr.f32.mxu0 0.0
        %1128 = vmatmul.mubr.f32.gmra.mrb[0].mxu0 %v899
        %v1129 = vpop.f32.mrb[0].mxu0
        %v1130 = vadd.f32 0.0, %v1129
        %v1131 = vpop.f32.mrb[0].mxu0
        %v1132 = vadd.f32 0.0, %v1131
        %1133 = vmatprep.mubr.f32.mxu0 0.0
        %1134 = vmatmul.mubr.f32.gmra.mrb[0].mxu0 %v902
        %v1135 = vpop.f32.mrb[0].mxu0
        %v1136 = vadd.f32 0.0, %v1135
        %v1137 = vpop.f32.mrb[0].mxu0
        %v1138 = vadd.f32 0.0, %v1137
        %1139 = vmatprep.mubr.f32.mxu0 0.0
        %1140 = vmatmul.mubr.f32.gmra.mrb[0].mxu0 %v905
        %v1141 = vpop.f32.mrb[0].mxu0
        %v1142 = vadd.f32 0.0, %v1141
        %v1143 = vpop.f32.mrb[0].mxu0
        %v1144 = vadd.f32 0.0, %v1143
        %1145 = vmatprep.mubr.f32.mxu0 0.0
        %1146 = vmatmul.mubr.f32.gmra.mrb[0].mxu0 %v908
        %v1147 = vpop.f32.mrb[0].mxu0
        %v1148 = vadd.f32 0.0, %v1147
        %v1149 = vpop.f32.mrb[0].mxu0
        %v1150 = vadd.f32 0.0, %v1149
        %1151 = vmatprep.mubr.f32.mxu0 0.0
        %1152 = vmatmul.mubr.f32.gmra.mrb[0].mxu0 %v911
        %v1153 = vpop.f32.mrb[0].mxu0
        %v1154 = vadd.f32 0.0, %v1153
        %v1155 = vpop.f32.mrb[0].mxu0
        %v1156 = vadd.f32 0.0, %v1155
        %1157 = vmatprep.mubr.f32.mxu0 0.0
        %1158 = vmatmul.mubr.f32.gmra.mrb[0].mxu0 %v914
        %v1159 = vpop.f32.mrb[0].mxu0
        %v1160 = vadd.f32 0.0, %v1159
        %v1161 = vpop.f32.mrb[0].mxu0
        %v1162 = vadd.f32 0.0, %v1161
        %1163 = vmatprep.mubr.f32.mxu0 0.0
        %1164 = vmatmul.mubr.f32.gmra.mrb[0].mxu0 %v917
        %v1165 = vpop.f32.mrb[0].mxu0
        %v1166 = vadd.f32 0.0, %v1165
        %v1167 = vpop.f32.mrb[0].mxu0
        %v1168 = vadd.f32 0.0, %v1167
        %1169 = vmatprep.mubr.f32.mxu0 0.0
        %1170 = vmatmul.mubr.f32.gmra.mrb[0].mxu0 %v920
        %v1171 = vpop.f32.mrb[0].mxu0
        %v1172 = vadd.f32 0.0, %v1171
        %v1173 = vpop.f32.mrb[0].mxu0
        %v1174 = vadd.f32 0.0, %v1173
        %1175 = vmatprep.mubr.f32.mxu0 0.0
        %1176 = vmatmul.mubr.f32.gmra.mrb[0].mxu0 %v923
        %v1177 = vpop.f32.mrb[0].mxu0
        %v1178 = vadd.f32 0.0, %v1177
        %v1179 = vpop.f32.mrb[0].mxu0
        %v1180 = vadd.f32 0.0, %v1179
        %1181 = vdwg.mxu0
        %v1183 = vsel %vm636, %v797, 0
        %v1186 = vsel %vm636, %v798, 0
        %v1189 = vsel %vm636, %v799, 0
        %v1192 = vsel %vm636, %v800, 0
        %v1195 = vsel %vm636, %v801, 0
        %v1198 = vsel %vm636, %v802, 0
        %v1201 = vsel %vm636, %v803, 0
        %v1204 = vsel %vm636, %v804, 0
        %v1207 = vsel %vm636, %v805, 0
        %v1210 = vsel %vm636, %v806, 0
        %v1213 = vsel %vm636, %v807, 0
        %v1216 = vsel %vm636, %v808, 0
        %v1219 = vsel %vm636, %v809, 0
        %v1222 = vsel %vm636, %v810, 0
        %v1225 = vsel %vm636, %v811, 0
        %v1228 = vsel %vm636, %v812, 0
        %v1231 = vsel %vm636, %v813, 0
        %v1234 = vsel %vm636, %v814, 0
        %v1237 = vsel %vm636, %v815, 0
        %v1240 = vsel %vm636, %v816, 0
        %v1243 = vsel %vm636, %v817, 0
        %v1246 = vsel %vm636, %v818, 0
        %v1249 = vsel %vm636, %v819, 0
        %v1252 = vsel %vm636, %v820, 0
        %v1255 = vsel %vm636, %v821, 0
        %v1258 = vsel %vm636, %v822, 0
        %v1261 = vsel %vm636, %v823, 0
        %v1264 = vsel %vm636, %v824, 0
        %v1267 = vsel %vm636, %v825, 0
        %v1270 = vsel %vm636, %v826, 0
        %v1273 = vsel %vm636, %v827, 0
        %v1276 = vsel %vm636, %v828, 0
        %1278 = vmatprep.subr.mxu0 0.0
        %1279 = vmatpush1.xpose.msra.mxu0 %v1183
        %1280 = vmatprep.subr.mxu0 0.0
        %1281 = vmatpush1.xpose.msra.mxu0 %v1186
        %1282 = vmatprep.subr.mxu0 0.0
        %1283 = vmatpush1.xpose.msra.mxu0 %v1189
        %1284 = vmatprep.subr.mxu0 0.0
        %1285 = vmatpush1.xpose.msra.mxu0 %v1192
        %1286 = vmatprep.subr.mxu0 0.0
        %1287 = vmatpush1.xpose.msra.mxu0 %v1195
        %1288 = vmatprep.subr.mxu0 0.0
        %1289 = vmatpush1.xpose.msra.mxu0 %v1198
        %1290 = vmatprep.subr.mxu0 0.0
        %1291 = vmatpush1.xpose.msra.mxu0 %v1201
        %1292 = vmatprep.subr.mxu0 0.0
        %1293 = vmatpush1.xpose.msra.mxu0 %v1204
        %1294 = vmatprep.subr.mxu0 0.0
        %1295 = vmatpush1.xpose.msra.mxu0 %v1207
        %1296 = vmatprep.subr.mxu0 0.0
        %1297 = vmatpush1.xpose.msra.mxu0 %v1210
        %1298 = vmatprep.subr.mxu0 0.0
        %1299 = vmatpush1.xpose.msra.mxu0 %v1213
        %1300 = vmatprep.subr.mxu0 0.0
        %1301 = vmatpush1.xpose.msra.mxu0 %v1216
        %1302 = vmatprep.subr.mxu0 0.0
        %1303 = vmatpush1.xpose.msra.mxu0 %v1219
        %1304 = vmatprep.subr.mxu0 0.0
        %1305 = vmatpush1.xpose.msra.mxu0 %v1222
        %1306 = vmatprep.subr.mxu0 0.0
        %1307 = vmatpush1.xpose.msra.mxu0 %v1225
        %1308 = vmatprep.subr.mxu0 0.0
        %1309 = vmatpush1.xpose.msra.mxu0 %v1228
        %1310 = vmatprep.subr.mxu0 0.0
        %1311 = vmatpush1.xpose.msra.mxu0 %v1231
        %1312 = vmatprep.subr.mxu0 0.0
        %1313 = vmatpush1.xpose.msra.mxu0 %v1234
        %1314 = vmatprep.subr.mxu0 0.0
        %1315 = vmatpush1.xpose.msra.mxu0 %v1237
        %1316 = vmatprep.subr.mxu0 0.0
        %1317 = vmatpush1.xpose.msra.mxu0 %v1240
        %1318 = vmatprep.subr.mxu0 0.0
        %1319 = vmatpush1.xpose.msra.mxu0 %v1243
        %1320 = vmatprep.subr.mxu0 0.0
        %1321 = vmatpush1.xpose.msra.mxu0 %v1246
        %1322 = vmatprep.subr.mxu0 0.0
        %1323 = vmatpush1.xpose.msra.mxu0 %v1249
        %1324 = vmatprep.subr.mxu0 0.0
        %1325 = vmatpush1.xpose.msra.mxu0 %v1252
        %1326 = vmatprep.subr.mxu0 0.0
        %1327 = vmatpush1.xpose.msra.mxu0 %v1255
        %1328 = vmatprep.subr.mxu0 0.0
        %1329 = vmatpush1.xpose.msra.mxu0 %v1258
        %1330 = vmatprep.subr.mxu0 0.0
        %1331 = vmatpush1.xpose.msra.mxu0 %v1261
        %1332 = vmatprep.subr.mxu0 0.0
        %1333 = vmatpush1.xpose.msra.mxu0 %v1264
        %1334 = vmatprep.subr.mxu0 0.0
        %1335 = vmatpush1.xpose.msra.mxu0 %v1267
        %1336 = vmatprep.subr.mxu0 0.0
        %1337 = vmatpush1.xpose.msra.mxu0 %v1270
        %1338 = vmatprep.subr.mxu0 0.0
        %1339 = vmatpush1.xpose.msra.mxu0 %v1273
        %1340 = vmatprep.subr.mxu0 0.0
        %1341 = vmatpush1.xpose.msra.mxu0 %v1276
        %1342 = vmatprep.mubr.f32.mxu0 0.0
        %1343 = vmatmul.mubr.f32.gmra.mrb[0].mxu0 %v1183
        %v1344 = vpop.f32.mrb[0].mxu0
        %v1345 = vadd.f32 0.0, %v1344
        %v1346 = vpop.f32.mrb[0].mxu0
        %v1347 = vadd.f32 0.0, %v1346
        %1348 = vmatprep.mubr.f32.mxu0 0.0
        %1349 = vmatmul.mubr.f32.gmra.mrb[0].mxu0 %v1186
        %v1350 = vpop.f32.mrb[0].mxu0
        %v1351 = vadd.f32 0.0, %v1350
        %v1352 = vpop.f32.mrb[0].mxu0
        %v1353 = vadd.f32 0.0, %v1352
        %1354 = vmatprep.mubr.f32.mxu0 0.0
        %1355 = vmatmul.mubr.f32.gmra.mrb[0].mxu0 %v1189
        %v1356 = vpop.f32.mrb[0].mxu0
        %v1357 = vadd.f32 0.0, %v1356
        %v1358 = vpop.f32.mrb[0].mxu0
        %v1359 = vadd.f32 0.0, %v1358
        %1360 = vmatprep.mubr.f32.mxu0 0.0
        %1361 = vmatmul.mubr.f32.gmra.mrb[0].mxu0 %v1192
        %v1362 = vpop.f32.mrb[0].mxu0
        %v1363 = vadd.f32 0.0, %v1362
        %v1364 = vpop.f32.mrb[0].mxu0
        %v1365 = vadd.f32 0.0, %v1364
        %1366 = vmatprep.mubr.f32.mxu0 0.0
        %1367 = vmatmul.mubr.f32.gmra.mrb[0].mxu0 %v1195
        %v1368 = vpop.f32.mrb[0].mxu0
        %v1369 = vadd.f32 0.0, %v1368
        %v1370 = vpop.f32.mrb[0].mxu0
        %v1371 = vadd.f32 0.0, %v1370
        %1372 = vmatprep.mubr.f32.mxu0 0.0
        %1373 = vmatmul.mubr.f32.gmra.mrb[0].mxu0 %v1198
        %v1374 = vpop.f32.mrb[0].mxu0
        %v1375 = vadd.f32 0.0, %v1374
        %v1376 = vpop.f32.mrb[0].mxu0
        %v1377 = vadd.f32 0.0, %v1376
        %1378 = vmatprep.mubr.f32.mxu0 0.0
        %1379 = vmatmul.mubr.f32.gmra.mrb[0].mxu0 %v1201
        %v1380 = vpop.f32.mrb[0].mxu0
        %v1381 = vadd.f32 0.0, %v1380
        %v1382 = vpop.f32.mrb[0].mxu0
        %v1383 = vadd.f32 0.0, %v1382
        %1384 = vmatprep.mubr.f32.mxu0 0.0
        %1385 = vmatmul.mubr.f32.gmra.mrb[0].mxu0 %v1204
        %v1386 = vpop.f32.mrb[0].mxu0
        %v1387 = vadd.f32 0.0, %v1386
        %v1388 = vpop.f32.mrb[0].mxu0
        %v1389 = vadd.f32 0.0, %v1388
        %1390 = vmatprep.mubr.f32.mxu0 0.0
        %1391 = vmatmul.mubr.f32.gmra.mrb[0].mxu0 %v1207
        %v1392 = vpop.f32.mrb[0].mxu0
        %v1393 = vadd.f32 0.0, %v1392
        %v1394 = vpop.f32.mrb[0].mxu0
        %v1395 = vadd.f32 0.0, %v1394
        %1396 = vmatprep.mubr.f32.mxu0 0.0
        %1397 = vmatmul.mubr.f32.gmra.mrb[0].mxu0 %v1210
        %v1398 = vpop.f32.mrb[0].mxu0
        %v1399 = vadd.f32 0.0, %v1398
        %v1400 = vpop.f32.mrb[0].mxu0
        %v1401 = vadd.f32 0.0, %v1400
        %1402 = vmatprep.mubr.f32.mxu0 0.0
        %1403 = vmatmul.mubr.f32.gmra.mrb[0].mxu0 %v1213
        %v1404 = vpop.f32.mrb[0].mxu0
        %v1405 = vadd.f32 0.0, %v1404
        %v1406 = vpop.f32.mrb[0].mxu0
        %v1407 = vadd.f32 0.0, %v1406
        %1408 = vmatprep.mubr.f32.mxu0 0.0
        %1409 = vmatmul.mubr.f32.gmra.mrb[0].mxu0 %v1216
        %v1410 = vpop.f32.mrb[0].mxu0
        %v1411 = vadd.f32 0.0, %v1410
        %v1412 = vpop.f32.mrb[0].mxu0
        %v1413 = vadd.f32 0.0, %v1412
        %1414 = vmatprep.mubr.f32.mxu0 0.0
        %1415 = vmatmul.mubr.f32.gmra.mrb[0].mxu0 %v1219
        %v1416 = vpop.f32.mrb[0].mxu0
        %v1417 = vadd.f32 0.0, %v1416
        %v1418 = vpop.f32.mrb[0].mxu0
        %v1419 = vadd.f32 0.0, %v1418
        %1420 = vmatprep.mubr.f32.mxu0 0.0
        %1421 = vmatmul.mubr.f32.gmra.mrb[0].mxu0 %v1222
        %v1422 = vpop.f32.mrb[0].mxu0
        %v1423 = vadd.f32 0.0, %v1422
        %v1424 = vpop.f32.mrb[0].mxu0
        %v1425 = vadd.f32 0.0, %v1424
        %1426 = vmatprep.mubr.f32.mxu0 0.0
        %1427 = vmatmul.mubr.f32.gmra.mrb[0].mxu0 %v1225
        %v1428 = vpop.f32.mrb[0].mxu0
        %v1429 = vadd.f32 0.0, %v1428
        %v1430 = vpop.f32.mrb[0].mxu0
        %v1431 = vadd.f32 0.0, %v1430
        %1432 = vmatprep.mubr.f32.mxu0 0.0
        %1433 = vmatmul.mubr.f32.gmra.mrb[0].mxu0 %v1228
        %v1434 = vpop.f32.mrb[0].mxu0
        %v1435 = vadd.f32 0.0, %v1434
        %v1436 = vpop.f32.mrb[0].mxu0
        %v1437 = vadd.f32 0.0, %v1436
        %1438 = vmatprep.mubr.f32.mxu0 0.0
        %1439 = vmatmul.mubr.f32.gmra.mrb[0].mxu0 %v1231
        %v1440 = vpop.f32.mrb[0].mxu0
        %v1441 = vadd.f32 0.0, %v1440
        %v1442 = vpop.f32.mrb[0].mxu0
        %v1443 = vadd.f32 0.0, %v1442
        %1444 = vmatprep.mubr.f32.mxu0 0.0
        %1445 = vmatmul.mubr.f32.gmra.mrb[0].mxu0 %v1234
        %v1446 = vpop.f32.mrb[0].mxu0
        %v1447 = vadd.f32 0.0, %v1446
        %v1448 = vpop.f32.mrb[0].mxu0
        %v1449 = vadd.f32 0.0, %v1448
        %1450 = vmatprep.mubr.f32.mxu0 0.0
        %1451 = vmatmul.mubr.f32.gmra.mrb[0].mxu0 %v1237
        %v1452 = vpop.f32.mrb[0].mxu0
        %v1453 = vadd.f32 0.0, %v1452
        %v1454 = vpop.f32.mrb[0].mxu0
        %v1455 = vadd.f32 0.0, %v1454
        %1456 = vmatprep.mubr.f32.mxu0 0.0
        %1457 = vmatmul.mubr.f32.gmra.mrb[0].mxu0 %v1240
        %v1458 = vpop.f32.mrb[0].mxu0
        %v1459 = vadd.f32 0.0, %v1458
        %v1460 = vpop.f32.mrb[0].mxu0
        %v1461 = vadd.f32 0.0, %v1460
        %1462 = vmatprep.mubr.f32.mxu0 0.0
        %1463 = vmatmul.mubr.f32.gmra.mrb[0].mxu0 %v1243
        %v1464 = vpop.f32.mrb[0].mxu0
        %v1465 = vadd.f32 0.0, %v1464
        %v1466 = vpop.f32.mrb[0].mxu0
        %v1467 = vadd.f32 0.0, %v1466
        %1468 = vmatprep.mubr.f32.mxu0 0.0
        %1469 = vmatmul.mubr.f32.gmra.mrb[0].mxu0 %v1246
        %v1470 = vpop.f32.mrb[0].mxu0
        %v1471 = vadd.f32 0.0, %v1470
        %v1472 = vpop.f32.mrb[0].mxu0
        %v1473 = vadd.f32 0.0, %v1472
        %1474 = vmatprep.mubr.f32.mxu0 0.0
        %1475 = vmatmul.mubr.f32.gmra.mrb[0].mxu0 %v1249
        %v1476 = vpop.f32.mrb[0].mxu0
        %v1477 = vadd.f32 0.0, %v1476
        %v1478 = vpop.f32.mrb[0].mxu0
        %v1479 = vadd.f32 0.0, %v1478
        %1480 = vmatprep.mubr.f32.mxu0 0.0
        %1481 = vmatmul.mubr.f32.gmra.mrb[0].mxu0 %v1252
        %v1482 = vpop.f32.mrb[0].mxu0
        %v1483 = vadd.f32 0.0, %v1482
        %v1484 = vpop.f32.mrb[0].mxu0
        %v1485 = vadd.f32 0.0, %v1484
        %1486 = vmatprep.mubr.f32.mxu0 0.0
        %1487 = vmatmul.mubr.f32.gmra.mrb[0].mxu0 %v1255
        %v1488 = vpop.f32.mrb[0].mxu0
        %v1489 = vadd.f32 0.0, %v1488
        %v1490 = vpop.f32.mrb[0].mxu0
        %v1491 = vadd.f32 0.0, %v1490
        %1492 = vmatprep.mubr.f32.mxu0 0.0
        %1493 = vmatmul.mubr.f32.gmra.mrb[0].mxu0 %v1258
        %v1494 = vpop.f32.mrb[0].mxu0
        %v1495 = vadd.f32 0.0, %v1494
        %v1496 = vpop.f32.mrb[0].mxu0
        %v1497 = vadd.f32 0.0, %v1496
        %1498 = vmatprep.mubr.f32.mxu0 0.0
        %1499 = vmatmul.mubr.f32.gmra.mrb[0].mxu0 %v1261
        %v1500 = vpop.f32.mrb[0].mxu0
        %v1501 = vadd.f32 0.0, %v1500
        %v1502 = vpop.f32.mrb[0].mxu0
        %v1503 = vadd.f32 0.0, %v1502
        %1504 = vmatprep.mubr.f32.mxu0 0.0
        %1505 = vmatmul.mubr.f32.gmra.mrb[0].mxu0 %v1264
        %v1506 = vpop.f32.mrb[0].mxu0
        %v1507 = vadd.f32 0.0, %v1506
        %v1508 = vpop.f32.mrb[0].mxu0
        %v1509 = vadd.f32 0.0, %v1508
        %1510 = vmatprep.mubr.f32.mxu0 0.0
        %1511 = vmatmul.mubr.f32.gmra.mrb[0].mxu0 %v1267
        %v1512 = vpop.f32.mrb[0].mxu0
        %v1513 = vadd.f32 0.0, %v1512
        %v1514 = vpop.f32.mrb[0].mxu0
        %v1515 = vadd.f32 0.0, %v1514
        %1516 = vmatprep.mubr.f32.mxu0 0.0
        %1517 = vmatmul.mubr.f32.gmra.mrb[0].mxu0 %v1270
        %v1518 = vpop.f32.mrb[0].mxu0
        %v1519 = vadd.f32 0.0, %v1518
        %v1520 = vpop.f32.mrb[0].mxu0
        %v1521 = vadd.f32 0.0, %v1520
        %1522 = vmatprep.mubr.f32.mxu0 0.0
        %1523 = vmatmul.mubr.f32.gmra.mrb[0].mxu0 %v1273
        %v1524 = vpop.f32.mrb[0].mxu0
        %v1525 = vadd.f32 0.0, %v1524
        %v1526 = vpop.f32.mrb[0].mxu0
        %v1527 = vadd.f32 0.0, %v1526
        %1528 = vmatprep.mubr.f32.mxu0 0.0
        %1529 = vmatmul.mubr.f32.gmra.mrb[0].mxu0 %v1276
        %v1530 = vpop.f32.mrb[0].mxu0
        %v1531 = vadd.f32 0.0, %v1530
        %v1532 = vpop.f32.mrb[0].mxu0
        %v1533 = vadd.f32 0.0, %v1532
        %1534 = vdwg.mxu0
        %1535 = vst [vmem:[%s275] sm:$0xff] %v1345
        %1536 = vst [vmem:[%s275 + $0x8] sm:$0xff] %v1347
        %1537 = vst [vmem:[%s275 + $0x10] sm:$0xff] %v1351
        %1538 = vst [vmem:[%s275 + $0x18] sm:$0xff] %v1353
        %1539 = vst [vmem:[%s275 + $0x20] sm:$0xff] %v1357
        %1540 = vst [vmem:[%s275 + $0x28] sm:$0xff] %v1359
        %1541 = vst [vmem:[%s275 + $0x30] sm:$0xff] %v1363
        %1542 = vst [vmem:[%s275 + $0x38] sm:$0xff] %v1365
        %1543 = vst [vmem:[%s275 + $0x40] sm:$0xff] %v1369
        %1544 = vst [vmem:[%s275 + $0x48] sm:$0xff] %v1371
        %1545 = vst [vmem:[%s275 + $0x50] sm:$0xff] %v1375
        %1546 = vst [vmem:[%s275 + $0x58] sm:$0xff] %v1377
        %1547 = vst [vmem:[%s275 + $0x60] sm:$0xff] %v1381
        %1548 = vst [vmem:[%s275 + $0x68] sm:$0xff] %v1383
        %1549 = vst [vmem:[%s275 + $0x70] sm:$0xff] %v1387
        %1550 = vst [vmem:[%s275 + $0x78] sm:$0xff] %v1389
        %1551 = vst [vmem:[%s275 + $0x80] sm:$0xff] %v1393
        %1552 = vst [vmem:[%s275 + $0x88] sm:$0xff] %v1395
        %1553 = vst [vmem:[%s275 + $0x90] sm:$0xff] %v1399
        %1554 = vst [vmem:[%s275 + $0x98] sm:$0xff] %v1401
        %1555 = vst [vmem:[%s275 + $0xa0] sm:$0xff] %v1405
        %1556 = vst [vmem:[%s275 + $0xa8] sm:$0xff] %v1407
        %1557 = vst [vmem:[%s275 + $0xb0] sm:$0xff] %v1411
        %1558 = vst [vmem:[%s275 + $0xb8] sm:$0xff] %v1413
        %1559 = vst [vmem:[%s275 + $0xc0] sm:$0xff] %v1417
        %1560 = vst [vmem:[%s275 + $0xc8] sm:$0xff] %v1419
        %1561 = vst [vmem:[%s275 + $0xd0] sm:$0xff] %v1423
        %1562 = vst [vmem:[%s275 + $0xd8] sm:$0xff] %v1425
        %1563 = vst [vmem:[%s275 + $0xe0] sm:$0xff] %v1429
        %1564 = vst [vmem:[%s275 + $0xe8] sm:$0xff] %v1431
        %1565 = vst [vmem:[%s275 + $0xf0] sm:$0xff] %v1435
        %1566 = vst [vmem:[%s275 + $0xf8] sm:$0xff] %v1437
        %1567 = vst [vmem:[%s275 + $0x100] sm:$0xff] %v1441
        %1568 = vst [vmem:[%s275 + $0x108] sm:$0xff] %v1443
        %1569 = vst [vmem:[%s275 + $0x110] sm:$0xff] %v1447
        %1570 = vst [vmem:[%s275 + $0x118] sm:$0xff] %v1449
        %1571 = vst [vmem:[%s275 + $0x120] sm:$0xff] %v1453
        %1572 = vst [vmem:[%s275 + $0x128] sm:$0xff] %v1455
        %1573 = vst [vmem:[%s275 + $0x130] sm:$0xff] %v1459
        %1574 = vst [vmem:[%s275 + $0x138] sm:$0xff] %v1461
        %1575 = vst [vmem:[%s275 + $0x140] sm:$0xff] %v1465
        %1576 = vst [vmem:[%s275 + $0x148] sm:$0xff] %v1467
        %1577 = vst [vmem:[%s275 + $0x150] sm:$0xff] %v1471
        %1578 = vst [vmem:[%s275 + $0x158] sm:$0xff] %v1473
        %1579 = vst [vmem:[%s275 + $0x160] sm:$0xff] %v1477
        %1580 = vst [vmem:[%s275 + $0x168] sm:$0xff] %v1479
        %1581 = vst [vmem:[%s275 + $0x170] sm:$0xff] %v1483
        %1582 = vst [vmem:[%s275 + $0x178] sm:$0xff] %v1485
        %1583 = vst [vmem:[%s275 + $0x180] sm:$0xff] %v1489
        %1584 = vst [vmem:[%s275 + $0x188] sm:$0xff] %v1491
        %1585 = vst [vmem:[%s275 + $0x190] sm:$0xff] %v1495
        %1586 = vst [vmem:[%s275 + $0x198] sm:$0xff] %v1497
        %1587 = vst [vmem:[%s275 + $0x1a0] sm:$0xff] %v1501
        %1588 = vst [vmem:[%s275 + $0x1a8] sm:$0xff] %v1503
        %1589 = vst [vmem:[%s275 + $0x1b0] sm:$0xff] %v1507
        %1590 = vst [vmem:[%s275 + $0x1b8] sm:$0xff] %v1509
        %1591 = vst [vmem:[%s275 + $0x1c0] sm:$0xff] %v1513
        %1592 = vst [vmem:[%s275 + $0x1c8] sm:$0xff] %v1515
        %1593 = vst [vmem:[%s275 + $0x1d0] sm:$0xff] %v1519
        %1594 = vst [vmem:[%s275 + $0x1d8] sm:$0xff] %v1521
        %1595 = vst [vmem:[%s275 + $0x1e0] sm:$0xff] %v1525
        %1596 = vst [vmem:[%s275 + $0x1e8] sm:$0xff] %v1527
        %1597 = vst [vmem:[%s275 + $0x1f0] sm:$0xff] %v1531
        %1598 = vst [vmem:[%s275 + $0x1f8] sm:$0xff] %v1533
        %v1599 = vmax.f32 %v1345, 0.0
        %v1600 = vmax.f32 %v1347, 0.0
        %v1601 = vmax.f32 %v1351, 0.0
        %v1602 = vmax.f32 %v1353, 0.0
        %v1603 = vmax.f32 %v1357, 0.0
        %v1604 = vmax.f32 %v1359, 0.0
        %v1605 = vmax.f32 %v1363, 0.0
        %v1606 = vmax.f32 %v1365, 0.0
        %v1607 = vmax.f32 %v1369, 0.0
        %v1608 = vmax.f32 %v1371, 0.0
        %v1609 = vmax.f32 %v1375, 0.0
        %v1610 = vmax.f32 %v1377, 0.0
        %v1611 = vmax.f32 %v1381, 0.0
        %v1612 = vmax.f32 %v1383, 0.0
        %v1613 = vmax.f32 %v1387, 0.0
        %v1614 = vmax.f32 %v1389, 0.0
        %v1615 = vmax.f32 %v1393, 0.0
        %v1616 = vmax.f32 %v1395, 0.0
        %v1617 = vmax.f32 %v1399, 0.0
        %v1618 = vmax.f32 %v1401, 0.0
        %v1619 = vmax.f32 %v1405, 0.0
        %v1620 = vmax.f32 %v1407, 0.0
        %v1621 = vmax.f32 %v1411, 0.0
        %v1622 = vmax.f32 %v1413, 0.0
        %v1623 = vmax.f32 %v1417, 0.0
        %v1624 = vmax.f32 %v1419, 0.0
        %v1625 = vmax.f32 %v1423, 0.0
        %v1626 = vmax.f32 %v1425, 0.0
        %v1627 = vmax.f32 %v1429, 0.0
        %v1628 = vmax.f32 %v1431, 0.0
        %v1629 = vmax.f32 %v1435, 0.0
        %v1630 = vmax.f32 %v1437, 0.0
        %v1631 = vmax.f32 %v1441, 0.0
        %v1632 = vmax.f32 %v1443, 0.0
        %v1633 = vmax.f32 %v1447, 0.0
        %v1634 = vmax.f32 %v1449, 0.0
        %v1635 = vmax.f32 %v1453, 0.0
        %v1636 = vmax.f32 %v1455, 0.0
        %v1637 = vmax.f32 %v1459, 0.0
        %v1638 = vmax.f32 %v1461, 0.0
        %v1639 = vmax.f32 %v1465, 0.0
        %v1640 = vmax.f32 %v1467, 0.0
        %v1641 = vmax.f32 %v1471, 0.0
        %v1642 = vmax.f32 %v1473, 0.0
        %v1643 = vmax.f32 %v1477, 0.0
        %v1644 = vmax.f32 %v1479, 0.0
        %v1645 = vmax.f32 %v1483, 0.0
        %v1646 = vmax.f32 %v1485, 0.0
        %v1647 = vmax.f32 %v1489, 0.0
        %v1648 = vmax.f32 %v1491, 0.0
        %v1649 = vmax.f32 %v1495, 0.0
        %v1650 = vmax.f32 %v1497, 0.0
        %v1651 = vmax.f32 %v1501, 0.0
        %v1652 = vmax.f32 %v1503, 0.0
        %v1653 = vmax.f32 %v1507, 0.0
        %v1654 = vmax.f32 %v1509, 0.0
        %v1655 = vmax.f32 %v1513, 0.0
        %v1656 = vmax.f32 %v1515, 0.0
        %v1657 = vmax.f32 %v1519, 0.0
        %v1658 = vmax.f32 %v1521, 0.0
        %v1659 = vmax.f32 %v1525, 0.0
        %v1660 = vmax.f32 %v1527, 0.0
        %v1661 = vmax.f32 %v1531, 0.0
        %v1662 = vmax.f32 %v1533, 0.0
        %v1663 = vmin.f32 %v1599, 0.8
        %v1664 = vmin.f32 %v1600, 0.8
        %v1665 = vmin.f32 %v1601, 0.8
        %v1666 = vmin.f32 %v1602, 0.8
        %v1667 = vmin.f32 %v1603, 0.8
        %v1668 = vmin.f32 %v1604, 0.8
        %v1669 = vmin.f32 %v1605, 0.8
        %v1670 = vmin.f32 %v1606, 0.8
        %v1671 = vmin.f32 %v1607, 0.8
        %v1672 = vmin.f32 %v1608, 0.8
        %v1673 = vmin.f32 %v1609, 0.8
        %v1674 = vmin.f32 %v1610, 0.8
        %v1675 = vmin.f32 %v1611, 0.8
        %v1676 = vmin.f32 %v1612, 0.8
        %v1677 = vmin.f32 %v1613, 0.8
        %v1678 = vmin.f32 %v1614, 0.8
        %v1679 = vmin.f32 %v1615, 0.8
        %v1680 = vmin.f32 %v1616, 0.8
        %v1681 = vmin.f32 %v1617, 0.8
        %v1682 = vmin.f32 %v1618, 0.8
        %v1683 = vmin.f32 %v1619, 0.8
        %v1684 = vmin.f32 %v1620, 0.8
        %v1685 = vmin.f32 %v1621, 0.8
        %v1686 = vmin.f32 %v1622, 0.8
        %v1687 = vmin.f32 %v1623, 0.8
        %v1688 = vmin.f32 %v1624, 0.8
        %v1689 = vmin.f32 %v1625, 0.8
        %v1690 = vmin.f32 %v1626, 0.8
        %v1691 = vmin.f32 %v1627, 0.8
        %v1692 = vmin.f32 %v1628, 0.8
        %v1693 = vmin.f32 %v1629, 0.8
        %v1694 = vmin.f32 %v1630, 0.8
        %v1695 = vmin.f32 %v1631, 0.8
        %v1696 = vmin.f32 %v1632, 0.8
        %v1697 = vmin.f32 %v1633, 0.8
        %v1698 = vmin.f32 %v1634, 0.8
        %v1699 = vmin.f32 %v1635, 0.8
        %v1700 = vmin.f32 %v1636, 0.8
        %v1701 = vmin.f32 %v1637, 0.8
        %v1702 = vmin.f32 %v1638, 0.8
        %v1703 = vmin.f32 %v1639, 0.8
        %v1704 = vmin.f32 %v1640, 0.8
        %v1705 = vmin.f32 %v1641, 0.8
        %v1706 = vmin.f32 %v1642, 0.8
        %v1707 = vmin.f32 %v1643, 0.8
        %v1708 = vmin.f32 %v1644, 0.8
        %v1709 = vmin.f32 %v1645, 0.8
        %v1710 = vmin.f32 %v1646, 0.8
        %v1711 = vmin.f32 %v1647, 0.8
        %v1712 = vmin.f32 %v1648, 0.8
        %v1713 = vmin.f32 %v1649, 0.8
        %v1714 = vmin.f32 %v1650, 0.8
        %v1715 = vmin.f32 %v1651, 0.8
        %v1716 = vmin.f32 %v1652, 0.8
        %v1717 = vmin.f32 %v1653, 0.8
        %v1718 = vmin.f32 %v1654, 0.8
        %v1719 = vmin.f32 %v1655, 0.8
        %v1720 = vmin.f32 %v1656, 0.8
        %v1721 = vmin.f32 %v1657, 0.8
        %v1722 = vmin.f32 %v1658, 0.8
        %v1723 = vmin.f32 %v1659, 0.8
        %v1724 = vmin.f32 %v1660, 0.8
        %v1725 = vmin.f32 %v1661, 0.8
        %v1726 = vmin.f32 %v1662, 0.8
        %v1727 = vadd.f32 %v992, %v994
        %1728 = vadd.xlane.f32.xlu0 %v1727
        %v1729 = vpop.xlane.xlu0 %1728
        %v1730 = vadd.f32 %v998, %v1000
        %1731 = vadd.xlane.f32.xlu0 %v1730
        %v1732 = vpop.xlane.xlu0 %1731
        %v1733 = vadd.f32 %v1004, %v1006
        %1734 = vadd.xlane.f32.xlu0 %v1733
        %v1735 = vpop.xlane.xlu0 %1734
        %v1736 = vadd.f32 %v1010, %v1012
        %1737 = vadd.xlane.f32.xlu0 %v1736
        %v1738 = vpop.xlane.xlu0 %1737
        %v1739 = vadd.f32 %v1016, %v1018
        %1740 = vadd.xlane.f32.xlu0 %v1739
        %v1741 = vpop.xlane.xlu0 %1740
        %v1742 = vadd.f32 %v1022, %v1024
        %1743 = vadd.xlane.f32.xlu0 %v1742
        %v1744 = vpop.xlane.xlu0 %1743
        %v1745 = vadd.f32 %v1028, %v1030
        %1746 = vadd.xlane.f32.xlu0 %v1745
        %v1747 = vpop.xlane.xlu0 %1746
        %v1748 = vadd.f32 %v1034, %v1036
        %1749 = vadd.xlane.f32.xlu0 %v1748
        %v1750 = vpop.xlane.xlu0 %1749
        %v1751 = vadd.f32 %v1040, %v1042
        %1752 = vadd.xlane.f32.xlu0 %v1751
        %v1753 = vpop.xlane.xlu0 %1752
        %v1754 = vadd.f32 %v1046, %v1048
        %1755 = vadd.xlane.f32.xlu0 %v1754
        %v1756 = vpop.xlane.xlu0 %1755
        %v1757 = vadd.f32 %v1052, %v1054
        %1758 = vadd.xlane.f32.xlu0 %v1757
        %v1759 = vpop.xlane.xlu0 %1758
        %v1760 = vadd.f32 %v1058, %v1060
        %1761 = vadd.xlane.f32.xlu0 %v1760
        %v1762 = vpop.xlane.xlu0 %1761
        %v1763 = vadd.f32 %v1064, %v1066
        %1764 = vadd.xlane.f32.xlu0 %v1763
        %v1765 = vpop.xlane.xlu0 %1764
        %v1766 = vadd.f32 %v1070, %v1072
        %1767 = vadd.xlane.f32.xlu0 %v1766
        %v1768 = vpop.xlane.xlu0 %1767
        %v1769 = vadd.f32 %v1076, %v1078
        %1770 = vadd.xlane.f32.xlu0 %v1769
        %v1771 = vpop.xlane.xlu0 %1770
        %v1772 = vadd.f32 %v1082, %v1084
        %1773 = vadd.xlane.f32.xlu0 %v1772
        %v1774 = vpop.xlane.xlu0 %1773
        %v1775 = vadd.f32 %v1088, %v1090
        %1776 = vadd.xlane.f32.xlu0 %v1775
        %v1777 = vpop.xlane.xlu0 %1776
        %v1778 = vadd.f32 %v1094, %v1096
        %1779 = vadd.xlane.f32.xlu0 %v1778
        %v1780 = vpop.xlane.xlu0 %1779
        %v1781 = vadd.f32 %v1100, %v1102
        %1782 = vadd.xlane.f32.xlu0 %v1781
        %v1783 = vpop.xlane.xlu0 %1782
        %v1784 = vadd.f32 %v1106, %v1108
        %1785 = vadd.xlane.f32.xlu0 %v1784
        %v1786 = vpop.xlane.xlu0 %1785
        %v1787 = vadd.f32 %v1112, %v1114
        %1788 = vadd.xlane.f32.xlu0 %v1787
        %v1789 = vpop.xlane.xlu0 %1788
        %v1790 = vadd.f32 %v1118, %v1120
        %1791 = vadd.xlane.f32.xlu0 %v1790
        %v1792 = vpop.xlane.xlu0 %1791
        %v1793 = vadd.f32 %v1124, %v1126
        %1794 = vadd.xlane.f32.xlu0 %v1793
        %v1795 = vpop.xlane.xlu0 %1794
        %v1796 = vadd.f32 %v1130, %v1132
        %1797 = vadd.xlane.f32.xlu0 %v1796
        %v1798 = vpop.xlane.xlu0 %1797
        %v1799 = vadd.f32 %v1136, %v1138
        %1800 = vadd.xlane.f32.xlu0 %v1799
        %v1801 = vpop.xlane.xlu0 %1800
        %v1802 = vadd.f32 %v1142, %v1144
        %1803 = vadd.xlane.f32.xlu0 %v1802
        %v1804 = vpop.xlane.xlu0 %1803
        %v1805 = vadd.f32 %v1148, %v1150
        %1806 = vadd.xlane.f32.xlu0 %v1805
        %v1807 = vpop.xlane.xlu0 %1806
        %v1808 = vadd.f32 %v1154, %v1156
        %1809 = vadd.xlane.f32.xlu0 %v1808
        %v1810 = vpop.xlane.xlu0 %1809
        %v1811 = vadd.f32 %v1160, %v1162
        %1812 = vadd.xlane.f32.xlu0 %v1811
        %v1813 = vpop.xlane.xlu0 %1812
        %v1814 = vadd.f32 %v1166, %v1168
        %1815 = vadd.xlane.f32.xlu0 %v1814
        %v1816 = vpop.xlane.xlu0 %1815
        %v1817 = vadd.f32 %v1172, %v1174
        %1818 = vadd.xlane.f32.xlu0 %v1817
        %v1819 = vpop.xlane.xlu0 %1818
        %v1820 = vadd.f32 %v1178, %v1180
        %1821 = vadd.xlane.f32.xlu0 %v1820
        %v1822 = vpop.xlane.xlu0 %1821
        %v1823 = vrcp.pop 256.0
        %v1824 = vmul.f32 %v1729, %v1823
        %v1825 = vmul.f32 %v1732, %v1823
        %v1826 = vmul.f32 %v1735, %v1823
        %v1827 = vmul.f32 %v1738, %v1823
        %v1828 = vmul.f32 %v1741, %v1823
        %v1829 = vmul.f32 %v1744, %v1823
        %v1830 = vmul.f32 %v1747, %v1823
        %v1831 = vmul.f32 %v1750, %v1823
        %v1832 = vmul.f32 %v1753, %v1823
        %v1833 = vmul.f32 %v1756, %v1823
        %v1834 = vmul.f32 %v1759, %v1823
        %v1835 = vmul.f32 %v1762, %v1823
        %v1836 = vmul.f32 %v1765, %v1823
        %v1837 = vmul.f32 %v1768, %v1823
        %v1838 = vmul.f32 %v1771, %v1823
        %v1839 = vmul.f32 %v1774, %v1823
        %v1840 = vmul.f32 %v1777, %v1823
        %v1841 = vmul.f32 %v1780, %v1823
        %v1842 = vmul.f32 %v1783, %v1823
        %v1843 = vmul.f32 %v1786, %v1823
        %v1844 = vmul.f32 %v1789, %v1823
        %v1845 = vmul.f32 %v1792, %v1823
        %v1846 = vmul.f32 %v1795, %v1823
        %v1847 = vmul.f32 %v1798, %v1823
        %v1848 = vmul.f32 %v1801, %v1823
        %v1849 = vmul.f32 %v1804, %v1823
        %v1850 = vmul.f32 %v1807, %v1823
        %v1851 = vmul.f32 %v1810, %v1823
        %v1852 = vmul.f32 %v1813, %v1823
        %v1853 = vmul.f32 %v1816, %v1823
        %v1854 = vmul.f32 %v1819, %v1823
        %v1855 = vmul.f32 %v1822, %v1823
        %v1856 = vsub.f32 %v992, %v1824
        %v1857 = vsub.f32 %v994, %v1824
        %v1858 = vsub.f32 %v998, %v1825
        %v1859 = vsub.f32 %v1000, %v1825
        %v1860 = vsub.f32 %v1004, %v1826
        %v1861 = vsub.f32 %v1006, %v1826
        %v1862 = vsub.f32 %v1010, %v1827
        %v1863 = vsub.f32 %v1012, %v1827
        %v1864 = vsub.f32 %v1016, %v1828
        %v1865 = vsub.f32 %v1018, %v1828
        %v1866 = vsub.f32 %v1022, %v1829
        %v1867 = vsub.f32 %v1024, %v1829
        %v1868 = vsub.f32 %v1028, %v1830
        %v1869 = vsub.f32 %v1030, %v1830
        %v1870 = vsub.f32 %v1034, %v1831
        %v1871 = vsub.f32 %v1036, %v1831
        %v1872 = vsub.f32 %v1040, %v1832
        %v1873 = vsub.f32 %v1042, %v1832
        %v1874 = vsub.f32 %v1046, %v1833
        %v1875 = vsub.f32 %v1048, %v1833
        %v1876 = vsub.f32 %v1052, %v1834
        %v1877 = vsub.f32 %v1054, %v1834
        %v1878 = vsub.f32 %v1058, %v1835
        %v1879 = vsub.f32 %v1060, %v1835
        %v1880 = vsub.f32 %v1064, %v1836
        %v1881 = vsub.f32 %v1066, %v1836
        %v1882 = vsub.f32 %v1070, %v1837
        %v1883 = vsub.f32 %v1072, %v1837
        %v1884 = vsub.f32 %v1076, %v1838
        %v1885 = vsub.f32 %v1078, %v1838
        %v1886 = vsub.f32 %v1082, %v1839
        %v1887 = vsub.f32 %v1084, %v1839
        %v1888 = vsub.f32 %v1088, %v1840
        %v1889 = vsub.f32 %v1090, %v1840
        %v1890 = vsub.f32 %v1094, %v1841
        %v1891 = vsub.f32 %v1096, %v1841
        %v1892 = vsub.f32 %v1100, %v1842
        %v1893 = vsub.f32 %v1102, %v1842
        %v1894 = vsub.f32 %v1106, %v1843
        %v1895 = vsub.f32 %v1108, %v1843
        %v1896 = vsub.f32 %v1112, %v1844
        %v1897 = vsub.f32 %v1114, %v1844
        %v1898 = vsub.f32 %v1118, %v1845
        %v1899 = vsub.f32 %v1120, %v1845
        %v1900 = vsub.f32 %v1124, %v1846
        %v1901 = vsub.f32 %v1126, %v1846
        %v1902 = vsub.f32 %v1130, %v1847
        %v1903 = vsub.f32 %v1132, %v1847
        %v1904 = vsub.f32 %v1136, %v1848
        %v1905 = vsub.f32 %v1138, %v1848
        %v1906 = vsub.f32 %v1142, %v1849
        %v1907 = vsub.f32 %v1144, %v1849
        %v1908 = vsub.f32 %v1148, %v1850
        %v1909 = vsub.f32 %v1150, %v1850
        %v1910 = vsub.f32 %v1154, %v1851
        %v1911 = vsub.f32 %v1156, %v1851
        %v1912 = vsub.f32 %v1160, %v1852
        %v1913 = vsub.f32 %v1162, %v1852
        %v1914 = vsub.f32 %v1166, %v1853
        %v1915 = vsub.f32 %v1168, %v1853
        %v1916 = vsub.f32 %v1172, %v1854
        %v1917 = vsub.f32 %v1174, %v1854
        %v1918 = vsub.f32 %v1178, %v1855
        %v1919 = vsub.f32 %v1180, %v1855
        %v1920 = vadd.f32 %v1824, %v1825
        %v1921 = vadd.f32 %v1920, %v1826
        %v1922 = vadd.f32 %v1921, %v1827
        %v1923 = vadd.f32 %v1922, %v1828
        %v1924 = vadd.f32 %v1923, %v1829
        %v1925 = vadd.f32 %v1924, %v1830
        %v1926 = vadd.f32 %v1925, %v1831
        %v1927 = vadd.f32 %v1926, %v1832
        %v1928 = vadd.f32 %v1927, %v1833
        %v1929 = vadd.f32 %v1928, %v1834
        %v1930 = vadd.f32 %v1929, %v1835
        %v1931 = vadd.f32 %v1930, %v1836
        %v1932 = vadd.f32 %v1931, %v1837
        %v1933 = vadd.f32 %v1932, %v1838
        %v1934 = vadd.f32 %v1933, %v1839
        %v1935 = vadd.f32 %v1934, %v1840
        %v1936 = vadd.f32 %v1935, %v1841
        %v1937 = vadd.f32 %v1936, %v1842
        %v1938 = vadd.f32 %v1937, %v1843
        %v1939 = vadd.f32 %v1938, %v1844
        %v1940 = vadd.f32 %v1939, %v1845
        %v1941 = vadd.f32 %v1940, %v1846
        %v1942 = vadd.f32 %v1941, %v1847
        %v1943 = vadd.f32 %v1942, %v1848
        %v1944 = vadd.f32 %v1943, %v1849
        %v1945 = vadd.f32 %v1944, %v1850
        %v1946 = vadd.f32 %v1945, %v1851
        %v1947 = vadd.f32 %v1946, %v1852
        %v1948 = vadd.f32 %v1947, %v1853
        %v1949 = vadd.f32 %v1948, %v1854
        %v1950 = vadd.f32 %v1949, %v1855
        %v1951 = vrot.slane %v1950, 4
        %v1952 = vadd.f32 %v1950, %v1951
        %v1953 = vrot.slane %v1952, 2
        %v1954 = vadd.f32 %v1952, %v1953
        %v1955 = vrot.slane %v1954, 1
        %v1956 = vadd.f32 %v1954, %v1955
        %v1957 = vmul.f32 %v1956, 256.0
        %vm1958 = vcmask 0
        %1959 = vst.msk [vmem:[%s314] sm:$0x1] %vm1958, %v1957
        %v1960 = vadd.f32 %v1663, %v1664
        %1961 = vadd.xlane.f32.xlu0 %v1960
        %v1962 = vpop.xlane.xlu0 %1961
        %v1963 = vadd.f32 %v1665, %v1666
        %1964 = vadd.xlane.f32.xlu0 %v1963
        %v1965 = vpop.xlane.xlu0 %1964
        %v1966 = vadd.f32 %v1667, %v1668
        %1967 = vadd.xlane.f32.xlu0 %v1966
        %v1968 = vpop.xlane.xlu0 %1967
        %v1969 = vadd.f32 %v1669, %v1670
        %1970 = vadd.xlane.f32.xlu0 %v1969
        %v1971 = vpop.xlane.xlu0 %1970
        %v1972 = vadd.f32 %v1671, %v1672
        %1973 = vadd.xlane.f32.xlu0 %v1972
        %v1974 = vpop.xlane.xlu0 %1973
        %v1975 = vadd.f32 %v1673, %v1674
        %1976 = vadd.xlane.f32.xlu0 %v1975
        %v1977 = vpop.xlane.xlu0 %1976
        %v1978 = vadd.f32 %v1675, %v1676
        %1979 = vadd.xlane.f32.xlu0 %v1978
        %v1980 = vpop.xlane.xlu0 %1979
        %v1981 = vadd.f32 %v1677, %v1678
        %1982 = vadd.xlane.f32.xlu0 %v1981
        %v1983 = vpop.xlane.xlu0 %1982
        %v1984 = vadd.f32 %v1679, %v1680
        %1985 = vadd.xlane.f32.xlu0 %v1984
        %v1986 = vpop.xlane.xlu0 %1985
        %v1987 = vadd.f32 %v1681, %v1682
        %1988 = vadd.xlane.f32.xlu0 %v1987
        %v1989 = vpop.xlane.xlu0 %1988
        %v1990 = vadd.f32 %v1683, %v1684
        %1991 = vadd.xlane.f32.xlu0 %v1990
        %v1992 = vpop.xlane.xlu0 %1991
        %v1993 = vadd.f32 %v1685, %v1686
        %1994 = vadd.xlane.f32.xlu0 %v1993
        %v1995 = vpop.xlane.xlu0 %1994
        %v1996 = vadd.f32 %v1687, %v1688
        %1997 = vadd.xlane.f32.xlu0 %v1996
        %v1998 = vpop.xlane.xlu0 %1997
        %v1999 = vadd.f32 %v1689, %v1690
        %2000 = vadd.xlane.f32.xlu0 %v1999
        %v2001 = vpop.xlane.xlu0 %2000
        %v2002 = vadd.f32 %v1691, %v1692
        %2003 = vadd.xlane.f32.xlu0 %v2002
        %v2004 = vpop.xlane.xlu0 %2003
        %v2005 = vadd.f32 %v1693, %v1694
        %2006 = vadd.xlane.f32.xlu0 %v2005
        %v2007 = vpop.xlane.xlu0 %2006
        %v2008 = vadd.f32 %v1695, %v1696
        %2009 = vadd.xlane.f32.xlu0 %v2008
        %v2010 = vpop.xlane.xlu0 %2009
        %v2011 = vadd.f32 %v1697, %v1698
        %2012 = vadd.xlane.f32.xlu0 %v2011
        %v2013 = vpop.xlane.xlu0 %2012
        %v2014 = vadd.f32 %v1699, %v1700
        %2015 = vadd.xlane.f32.xlu0 %v2014
        %v2016 = vpop.xlane.xlu0 %2015
        %v2017 = vadd.f32 %v1701, %v1702
        %2018 = vadd.xlane.f32.xlu0 %v2017
        %v2019 = vpop.xlane.xlu0 %2018
        %v2020 = vadd.f32 %v1703, %v1704
        %2021 = vadd.xlane.f32.xlu0 %v2020
        %v2022 = vpop.xlane.xlu0 %2021
        %v2023 = vadd.f32 %v1705, %v1706
        %2024 = vadd.xlane.f32.xlu0 %v2023
        %v2025 = vpop.xlane.xlu0 %2024
        %v2026 = vadd.f32 %v1707, %v1708
        %2027 = vadd.xlane.f32.xlu0 %v2026
        %v2028 = vpop.xlane.xlu0 %2027
        %v2029 = vadd.f32 %v1709, %v1710
        %2030 = vadd.xlane.f32.xlu0 %v2029
        %v2031 = vpop.xlane.xlu0 %2030
        %v2032 = vadd.f32 %v1711, %v1712
        %2033 = vadd.xlane.f32.xlu0 %v2032
        %v2034 = vpop.xlane.xlu0 %2033
        %v2035 = vadd.f32 %v1713, %v1714
        %2036 = vadd.xlane.f32.xlu0 %v2035
        %v2037 = vpop.xlane.xlu0 %2036
        %v2038 = vadd.f32 %v1715, %v1716
        %2039 = vadd.xlane.f32.xlu0 %v2038
        %v2040 = vpop.xlane.xlu0 %2039
        %v2041 = vadd.f32 %v1717, %v1718
        %2042 = vadd.xlane.f32.xlu0 %v2041
        %v2043 = vpop.xlane.xlu0 %2042
        %v2044 = vadd.f32 %v1719, %v1720
        %2045 = vadd.xlane.f32.xlu0 %v2044
        %v2046 = vpop.xlane.xlu0 %2045
        %v2047 = vadd.f32 %v1721, %v1722
        %2048 = vadd.xlane.f32.xlu0 %v2047
        %v2049 = vpop.xlane.xlu0 %2048
        %v2050 = vadd.f32 %v1723, %v1724
        %2051 = vadd.xlane.f32.xlu0 %v2050
        %v2052 = vpop.xlane.xlu0 %2051
        %v2053 = vadd.f32 %v1725, %v1726
        %2054 = vadd.xlane.f32.xlu0 %v2053
        %v2055 = vpop.xlane.xlu0 %2054
        %v2056 = vmul.f32 %v1663, %v1856
        %v2057 = vmul.f32 %v1664, %v1857
        %v2058 = vmul.f32 %v1665, %v1858
        %v2059 = vmul.f32 %v1666, %v1859
        %v2060 = vmul.f32 %v1667, %v1860
        %v2061 = vmul.f32 %v1668, %v1861
        %v2062 = vmul.f32 %v1669, %v1862
        %v2063 = vmul.f32 %v1670, %v1863
        %v2064 = vmul.f32 %v1671, %v1864
        %v2065 = vmul.f32 %v1672, %v1865
        %v2066 = vmul.f32 %v1673, %v1866
        %v2067 = vmul.f32 %v1674, %v1867
        %v2068 = vmul.f32 %v1675, %v1868
        %v2069 = vmul.f32 %v1676, %v1869
        %v2070 = vmul.f32 %v1677, %v1870
        %v2071 = vmul.f32 %v1678, %v1871
        %v2072 = vmul.f32 %v1679, %v1872
        %v2073 = vmul.f32 %v1680, %v1873
        %v2074 = vmul.f32 %v1681, %v1874
        %v2075 = vmul.f32 %v1682, %v1875
        %v2076 = vmul.f32 %v1683, %v1876
        %v2077 = vmul.f32 %v1684, %v1877
        %v2078 = vmul.f32 %v1685, %v1878
        %v2079 = vmul.f32 %v1686, %v1879
        %v2080 = vmul.f32 %v1687, %v1880
        %v2081 = vmul.f32 %v1688, %v1881
        %v2082 = vmul.f32 %v1689, %v1882
        %v2083 = vmul.f32 %v1690, %v1883
        %v2084 = vmul.f32 %v1691, %v1884
        %v2085 = vmul.f32 %v1692, %v1885
        %v2086 = vmul.f32 %v1693, %v1886
        %v2087 = vmul.f32 %v1694, %v1887
        %v2088 = vmul.f32 %v1695, %v1888
        %v2089 = vmul.f32 %v1696, %v1889
        %v2090 = vmul.f32 %v1697, %v1890
        %v2091 = vmul.f32 %v1698, %v1891
        %v2092 = vmul.f32 %v1699, %v1892
        %v2093 = vmul.f32 %v1700, %v1893
        %v2094 = vmul.f32 %v1701, %v1894
        %v2095 = vmul.f32 %v1702, %v1895
        %v2096 = vmul.f32 %v1703, %v1896
        %v2097 = vmul.f32 %v1704, %v1897
        %v2098 = vmul.f32 %v1705, %v1898
        %v2099 = vmul.f32 %v1706, %v1899
        %v2100 = vmul.f32 %v1707, %v1900
        %v2101 = vmul.f32 %v1708, %v1901
        %v2102 = vmul.f32 %v1709, %v1902
        %v2103 = vmul.f32 %v1710, %v1903
        %v2104 = vmul.f32 %v1711, %v1904
        %v2105 = vmul.f32 %v1712, %v1905
        %v2106 = vmul.f32 %v1713, %v1906
        %v2107 = vmul.f32 %v1714, %v1907
        %v2108 = vmul.f32 %v1715, %v1908
        %v2109 = vmul.f32 %v1716, %v1909
        %v2110 = vmul.f32 %v1717, %v1910
        %v2111 = vmul.f32 %v1718, %v1911
        %v2112 = vmul.f32 %v1719, %v1912
        %v2113 = vmul.f32 %v1720, %v1913
        %v2114 = vmul.f32 %v1721, %v1914
        %v2115 = vmul.f32 %v1722, %v1915
        %v2116 = vmul.f32 %v1723, %v1916
        %v2117 = vmul.f32 %v1724, %v1917
        %v2118 = vmul.f32 %v1725, %v1918
        %v2119 = vmul.f32 %v1726, %v1919
        %v2120 = vadd.f32 %v2056, %v2057
        %2121 = vadd.xlane.f32.xlu0 %v2120
        %v2122 = vpop.xlane.xlu0 %2121
        %v2123 = vadd.f32 %v2058, %v2059
        %2124 = vadd.xlane.f32.xlu0 %v2123
        %v2125 = vpop.xlane.xlu0 %2124
        %v2126 = vadd.f32 %v2060, %v2061
        %2127 = vadd.xlane.f32.xlu0 %v2126
        %v2128 = vpop.xlane.xlu0 %2127
        %v2129 = vadd.f32 %v2062, %v2063
        %2130 = vadd.xlane.f32.xlu0 %v2129
        %v2131 = vpop.xlane.xlu0 %2130
        %v2132 = vadd.f32 %v2064, %v2065
        %2133 = vadd.xlane.f32.xlu0 %v2132
        %v2134 = vpop.xlane.xlu0 %2133
        %v2135 = vadd.f32 %v2066, %v2067
        %2136 = vadd.xlane.f32.xlu0 %v2135
        %v2137 = vpop.xlane.xlu0 %2136
        %v2138 = vadd.f32 %v2068, %v2069
        %2139 = vadd.xlane.f32.xlu0 %v2138
        %v2140 = vpop.xlane.xlu0 %2139
        %v2141 = vadd.f32 %v2070, %v2071
        %2142 = vadd.xlane.f32.xlu0 %v2141
        %v2143 = vpop.xlane.xlu0 %2142
        %v2144 = vadd.f32 %v2072, %v2073
        %2145 = vadd.xlane.f32.xlu0 %v2144
        %v2146 = vpop.xlane.xlu0 %2145
        %v2147 = vadd.f32 %v2074, %v2075
        %2148 = vadd.xlane.f32.xlu0 %v2147
        %v2149 = vpop.xlane.xlu0 %2148
        %v2150 = vadd.f32 %v2076, %v2077
        %2151 = vadd.xlane.f32.xlu0 %v2150
        %v2152 = vpop.xlane.xlu0 %2151
        %v2153 = vadd.f32 %v2078, %v2079
        %2154 = vadd.xlane.f32.xlu0 %v2153
        %v2155 = vpop.xlane.xlu0 %2154
        %v2156 = vadd.f32 %v2080, %v2081
        %2157 = vadd.xlane.f32.xlu0 %v2156
        %v2158 = vpop.xlane.xlu0 %2157
        %v2159 = vadd.f32 %v2082, %v2083
        %2160 = vadd.xlane.f32.xlu0 %v2159
        %v2161 = vpop.xlane.xlu0 %2160
        %v2162 = vadd.f32 %v2084, %v2085
        %2163 = vadd.xlane.f32.xlu0 %v2162
        %v2164 = vpop.xlane.xlu0 %2163
        %v2165 = vadd.f32 %v2086, %v2087
        %2166 = vadd.xlane.f32.xlu0 %v2165
        %v2167 = vpop.xlane.xlu0 %2166
        %v2168 = vadd.f32 %v2088, %v2089
        %2169 = vadd.xlane.f32.xlu0 %v2168
        %v2170 = vpop.xlane.xlu0 %2169
        %v2171 = vadd.f32 %v2090, %v2091
        %2172 = vadd.xlane.f32.xlu0 %v2171
        %v2173 = vpop.xlane.xlu0 %2172
        %v2174 = vadd.f32 %v2092, %v2093
        %2175 = vadd.xlane.f32.xlu0 %v2174
        %v2176 = vpop.xlane.xlu0 %2175
        %v2177 = vadd.f32 %v2094, %v2095
        %2178 = vadd.xlane.f32.xlu0 %v2177
        %v2179 = vpop.xlane.xlu0 %2178
        %v2180 = vadd.f32 %v2096, %v2097
        %2181 = vadd.xlane.f32.xlu0 %v2180
        %v2182 = vpop.xlane.xlu0 %2181
        %v2183 = vadd.f32 %v2098, %v2099
        %2184 = vadd.xlane.f32.xlu0 %v2183
        %v2185 = vpop.xlane.xlu0 %2184
        %v2186 = vadd.f32 %v2100, %v2101
        %2187 = vadd.xlane.f32.xlu0 %v2186
        %v2188 = vpop.xlane.xlu0 %2187
        %v2189 = vadd.f32 %v2102, %v2103
        %2190 = vadd.xlane.f32.xlu0 %v2189
        %v2191 = vpop.xlane.xlu0 %2190
        %v2192 = vadd.f32 %v2104, %v2105
        %2193 = vadd.xlane.f32.xlu0 %v2192
        %v2194 = vpop.xlane.xlu0 %2193
        %v2195 = vadd.f32 %v2106, %v2107
        %2196 = vadd.xlane.f32.xlu0 %v2195
        %v2197 = vpop.xlane.xlu0 %2196
        %v2198 = vadd.f32 %v2108, %v2109
        %2199 = vadd.xlane.f32.xlu0 %v2198
        %v2200 = vpop.xlane.xlu0 %2199
        %v2201 = vadd.f32 %v2110, %v2111
        %2202 = vadd.xlane.f32.xlu0 %v2201
        %v2203 = vpop.xlane.xlu0 %2202
        %v2204 = vadd.f32 %v2112, %v2113
        %2205 = vadd.xlane.f32.xlu0 %v2204
        %v2206 = vpop.xlane.xlu0 %2205
        %v2207 = vadd.f32 %v2114, %v2115
        %2208 = vadd.xlane.f32.xlu0 %v2207
        %v2209 = vpop.xlane.xlu0 %2208
        %v2210 = vadd.f32 %v2116, %v2117
        %2211 = vadd.xlane.f32.xlu0 %v2210
        %v2212 = vpop.xlane.xlu0 %2211
        %v2213 = vadd.f32 %v2118, %v2119
        %2214 = vadd.xlane.f32.xlu0 %v2213
        %v2215 = vpop.xlane.xlu0 %2214
        %v2216 = vld [vmem:[%s305] sm:$0xff]
        %v2217 = vld [vmem:[%s305 + $0x8] sm:$0xff]
        %v2218 = vld [vmem:[%s305 + $0x10] sm:$0xff]
        %v2219 = vld [vmem:[%s305 + $0x18] sm:$0xff]
        %v2220 = vld [vmem:[%s305 + $0x20] sm:$0xff]
        %v2221 = vld [vmem:[%s305 + $0x28] sm:$0xff]
        %v2222 = vld [vmem:[%s305 + $0x30] sm:$0xff]
        %v2223 = vld [vmem:[%s305 + $0x38] sm:$0xff]
        %v2224 = vld [vmem:[%s305 + $0x40] sm:$0xff]
        %v2225 = vld [vmem:[%s305 + $0x48] sm:$0xff]
        %v2226 = vld [vmem:[%s305 + $0x50] sm:$0xff]
        %v2227 = vld [vmem:[%s305 + $0x58] sm:$0xff]
        %v2228 = vld [vmem:[%s305 + $0x60] sm:$0xff]
        %v2229 = vld [vmem:[%s305 + $0x68] sm:$0xff]
        %v2230 = vld [vmem:[%s305 + $0x70] sm:$0xff]
        %v2231 = vld [vmem:[%s305 + $0x78] sm:$0xff]
        %v2232 = vld [vmem:[%s305 + $0x80] sm:$0xff]
        %v2233 = vld [vmem:[%s305 + $0x88] sm:$0xff]
        %v2234 = vld [vmem:[%s305 + $0x90] sm:$0xff]
        %v2235 = vld [vmem:[%s305 + $0x98] sm:$0xff]
        %v2236 = vld [vmem:[%s305 + $0xa0] sm:$0xff]
        %v2237 = vld [vmem:[%s305 + $0xa8] sm:$0xff]
        %v2238 = vld [vmem:[%s305 + $0xb0] sm:$0xff]
        %v2239 = vld [vmem:[%s305 + $0xb8] sm:$0xff]
        %v2240 = vld [vmem:[%s305 + $0xc0] sm:$0xff]
        %v2241 = vld [vmem:[%s305 + $0xc8] sm:$0xff]
        %v2242 = vld [vmem:[%s305 + $0xd0] sm:$0xff]
        %v2243 = vld [vmem:[%s305 + $0xd8] sm:$0xff]
        %v2244 = vld [vmem:[%s305 + $0xe0] sm:$0xff]
        %v2245 = vld [vmem:[%s305 + $0xe8] sm:$0xff]
        %v2246 = vld [vmem:[%s305 + $0xf0] sm:$0xff]
        %v2247 = vld [vmem:[%s305 + $0xf8] sm:$0xff]
        %v2248 = vmul.f32 %v2216, %v1962
        %v2249 = vmul.f32 %v2217, %v1965
        %v2250 = vmul.f32 %v2218, %v1968
        %v2251 = vmul.f32 %v2219, %v1971
        %v2252 = vmul.f32 %v2220, %v1974
        %v2253 = vmul.f32 %v2221, %v1977
        %v2254 = vmul.f32 %v2222, %v1980
        %v2255 = vmul.f32 %v2223, %v1983
        %v2256 = vmul.f32 %v2224, %v1986
        %v2257 = vmul.f32 %v2225, %v1989
        %v2258 = vmul.f32 %v2226, %v1992
        %v2259 = vmul.f32 %v2227, %v1995
        %v2260 = vmul.f32 %v2228, %v1998
        %v2261 = vmul.f32 %v2229, %v2001
        %v2262 = vmul.f32 %v2230, %v2004
        %v2263 = vmul.f32 %v2231, %v2007
        %v2264 = vmul.f32 %v2232, %v2010
        %v2265 = vmul.f32 %v2233, %v2013
        %v2266 = vmul.f32 %v2234, %v2016
        %v2267 = vmul.f32 %v2235, %v2019
        %v2268 = vmul.f32 %v2236, %v2022
        %v2269 = vmul.f32 %v2237, %v2025
        %v2270 = vmul.f32 %v2238, %v2028
        %v2271 = vmul.f32 %v2239, %v2031
        %v2272 = vmul.f32 %v2240, %v2034
        %v2273 = vmul.f32 %v2241, %v2037
        %v2274 = vmul.f32 %v2242, %v2040
        %v2275 = vmul.f32 %v2243, %v2043
        %v2276 = vmul.f32 %v2244, %v2046
        %v2277 = vmul.f32 %v2245, %v2049
        %v2278 = vmul.f32 %v2246, %v2052
        %v2279 = vmul.f32 %v2247, %v2055
        %v2280 = vsub.f32 %v2122, %v2248
        %v2281 = vsub.f32 %v2125, %v2249
        %v2282 = vsub.f32 %v2128, %v2250
        %v2283 = vsub.f32 %v2131, %v2251
        %v2284 = vsub.f32 %v2134, %v2252
        %v2285 = vsub.f32 %v2137, %v2253
        %v2286 = vsub.f32 %v2140, %v2254
        %v2287 = vsub.f32 %v2143, %v2255
        %v2288 = vsub.f32 %v2146, %v2256
        %v2289 = vsub.f32 %v2149, %v2257
        %v2290 = vsub.f32 %v2152, %v2258
        %v2291 = vsub.f32 %v2155, %v2259
        %v2292 = vsub.f32 %v2158, %v2260
        %v2293 = vsub.f32 %v2161, %v2261
        %v2294 = vsub.f32 %v2164, %v2262
        %v2295 = vsub.f32 %v2167, %v2263
        %v2296 = vsub.f32 %v2170, %v2264
        %v2297 = vsub.f32 %v2173, %v2265
        %v2298 = vsub.f32 %v2176, %v2266
        %v2299 = vsub.f32 %v2179, %v2267
        %v2300 = vsub.f32 %v2182, %v2268
        %v2301 = vsub.f32 %v2185, %v2269
        %v2302 = vsub.f32 %v2188, %v2270
        %v2303 = vsub.f32 %v2191, %v2271
        %v2304 = vsub.f32 %v2194, %v2272
        %v2305 = vsub.f32 %v2197, %v2273
        %v2306 = vsub.f32 %v2200, %v2274
        %v2307 = vsub.f32 %v2203, %v2275
        %v2308 = vsub.f32 %v2206, %v2276
        %v2309 = vsub.f32 %v2209, %v2277
        %v2310 = vsub.f32 %v2212, %v2278
        %v2311 = vsub.f32 %v2215, %v2279
        %vm2312 = vcmask 7168
        %v2313 = vsel %vm2312, %v2280, 0.0
        %v2314 = vsel %vm2312, %v2281, 0.0
        %v2315 = vadd.f32 %v2313, %v2314
        %v2316 = vsel %vm2312, %v2282, 0.0
        %v2317 = vadd.f32 %v2315, %v2316
        %v2318 = vsel %vm2312, %v2283, 0.0
        %v2319 = vadd.f32 %v2317, %v2318
        %v2320 = vsel %vm2312, %v2284, 0.0
        %v2321 = vadd.f32 %v2319, %v2320
        %v2322 = vsel %vm2312, %v2285, 0.0
        %v2323 = vadd.f32 %v2321, %v2322
        %v2324 = vsel %vm2312, %v2286, 0.0
        %v2325 = vadd.f32 %v2323, %v2324
        %v2326 = vsel %vm2312, %v2287, 0.0
        %v2327 = vadd.f32 %v2325, %v2326
        %v2328 = vsel %vm2312, %v2288, 0.0
        %v2329 = vadd.f32 %v2327, %v2328
        %v2330 = vsel %vm2312, %v2289, 0.0
        %v2331 = vadd.f32 %v2329, %v2330
        %v2332 = vsel %vm2312, %v2290, 0.0
        %v2333 = vadd.f32 %v2331, %v2332
        %v2334 = vsel %vm2312, %v2291, 0.0
        %v2335 = vadd.f32 %v2333, %v2334
        %v2336 = vsel %vm2312, %v2292, 0.0
        %v2337 = vadd.f32 %v2335, %v2336
        %v2338 = vsel %vm2312, %v2293, 0.0
        %v2339 = vadd.f32 %v2337, %v2338
        %v2340 = vsel %vm2312, %v2294, 0.0
        %v2341 = vadd.f32 %v2339, %v2340
        %v2342 = vsel %vm2312, %v2295, 0.0
        %v2343 = vadd.f32 %v2341, %v2342
        %v2344 = vsel %vm2312, %v2296, 0.0
        %v2345 = vadd.f32 %v2343, %v2344
        %v2346 = vsel %vm2312, %v2297, 0.0
        %v2347 = vadd.f32 %v2345, %v2346
        %v2348 = vsel %vm2312, %v2298, 0.0
        %v2349 = vadd.f32 %v2347, %v2348
        %v2350 = vsel %vm2312, %v2299, 0.0
        %v2351 = vadd.f32 %v2349, %v2350
        %v2352 = vsel %vm2312, %v2300, 0.0
        %v2353 = vadd.f32 %v2351, %v2352
        %v2354 = vsel %vm2312, %v2301, 0.0
        %v2355 = vadd.f32 %v2353, %v2354
        %v2356 = vsel %vm2312, %v2302, 0.0
        %v2357 = vadd.f32 %v2355, %v2356
        %v2358 = vsel %vm2312, %v2303, 0.0
        %v2359 = vadd.f32 %v2357, %v2358
        %v2360 = vsel %vm2312, %v2304, 0.0
        %v2361 = vadd.f32 %v2359, %v2360
        %v2362 = vsel %vm2312, %v2305, 0.0
        %v2363 = vadd.f32 %v2361, %v2362
        %v2364 = vsel %vm2312, %v2306, 0.0
        %v2365 = vadd.f32 %v2363, %v2364
        %v2366 = vsel %vm2312, %v2307, 0.0
        %v2367 = vadd.f32 %v2365, %v2366
        %v2368 = vsel %vm2312, %v2308, 0.0
        %v2369 = vadd.f32 %v2367, %v2368
        %v2370 = vsel %vm2312, %v2309, 0.0
        %v2371 = vadd.f32 %v2369, %v2370
        %v2372 = vsel %vm2312, %v2310, 0.0
        %v2373 = vadd.f32 %v2371, %v2372
        %v2374 = vsel %vm2312, %v2311, 0.0
        %v2375 = vadd.f32 %v2373, %v2374
        %v2376 = vrot.slane %v2375, 4
        %v2377 = vadd.f32 %v2375, %v2376
        %v2378 = vrot.slane %v2377, 2
        %v2379 = vadd.f32 %v2377, %v2378
        %v2380 = vrot.slane %v2379, 1
        %v2381 = vadd.f32 %v2379, %v2380
        %2382 = vst.msk [vmem:[%s308] sm:$0x1] %vm1958, %v2381
        %v2383 = vadd.f32 %v1962, %v1965
        %v2384 = vadd.f32 %v2383, %v1968
        %v2385 = vadd.f32 %v2384, %v1971
        %v2386 = vadd.f32 %v2385, %v1974
        %v2387 = vadd.f32 %v2386, %v1977
        %v2388 = vadd.f32 %v2387, %v1980
        %v2389 = vadd.f32 %v2388, %v1983
        %v2390 = vadd.f32 %v2389, %v1986
        %v2391 = vadd.f32 %v2390, %v1989
        %v2392 = vadd.f32 %v2391, %v1992
        %v2393 = vadd.f32 %v2392, %v1995
        %v2394 = vadd.f32 %v2393, %v1998
        %v2395 = vadd.f32 %v2394, %v2001
        %v2396 = vadd.f32 %v2395, %v2004
        %v2397 = vadd.f32 %v2396, %v2007
        %v2398 = vadd.f32 %v2397, %v2010
        %v2399 = vadd.f32 %v2398, %v2013
        %v2400 = vadd.f32 %v2399, %v2016
        %v2401 = vadd.f32 %v2400, %v2019
        %v2402 = vadd.f32 %v2401, %v2022
        %v2403 = vadd.f32 %v2402, %v2025
        %v2404 = vadd.f32 %v2403, %v2028
        %v2405 = vadd.f32 %v2404, %v2031
        %v2406 = vadd.f32 %v2405, %v2034
        %v2407 = vadd.f32 %v2406, %v2037
        %v2408 = vadd.f32 %v2407, %v2040
        %v2409 = vadd.f32 %v2408, %v2043
        %v2410 = vadd.f32 %v2409, %v2046
        %v2411 = vadd.f32 %v2410, %v2049
        %v2412 = vadd.f32 %v2411, %v2052
        %v2413 = vadd.f32 %v2412, %v2055
        %v2414 = vrot.slane %v2413, 4
        %v2415 = vadd.f32 %v2413, %v2414
        %v2416 = vrot.slane %v2415, 2
        %v2417 = vadd.f32 %v2415, %v2416
        %v2418 = vrot.slane %v2417, 1
        %v2419 = vadd.f32 %v2417, %v2418
        %2420 = vst.msk [vmem:[%s311] sm:$0x1] %vm1958, %v2419
        %s2421 = sand.u32 %s107, 1
        %s2422 = scalar_lea.sflag [#allocation3], %s2421
        %s2423 = sand.u32 %s107, 1
        %s2424 = smul.addr %s2423, 512
        %s2425 = scalar_lea.vmem [#allocation2], %s2424
        %p2426 = scmp.lt.s32.totalorder %s21, 1
        %s2427 = scalar_select %p2426, %s21, 1
        %s2428 = scalar_lea.vmem %s4, %s2427
        %p2429 = scmp.lt.s32.totalorder %s21, 1
        %s2430 = scalar_select %p2429, %s21, 1
        %s2431 = scalar_lea.vmem %s5, %s2430
        %p2432 = scmp.lt.s32.totalorder %s21, 1
        %s2433 = scalar_select %p2432, %s21, 1
        %s2434 = scalar_lea.vmem %s6, %s2433
        // Predicated region
        $region33: #{tpu_custom_call.1} parent=31 // pred_check
          %p2435 = pneg %p117
        $region34: #{tpu_custom_call.1} parent=31 // pred_check_branch
          %2437 = sbr.rel (%p2435) target = $region36
        $region35: #{tpu_custom_call.1} parent=31 // pred_region
          %s2439 = ssub.s32 8192, 8192
          %2440 = vsyncadd %s2422, %s2439
          %s2441 = smul.addr %s21, 64
          %s2442 = smul.addr %s2441, 128
          %s2443 = scalar_lea.hbm %s3, %s2442
          %s2444 = sshll.u32 %s2425, 4
          %s2445 = int_to_ptr.vmem [resolvable:$true] %s2444
          %2450 = dma.vmem_to_hbm [thread:$0]  %s2445, 8192, %s2443, %s2422, 256, 256, 16
        $region36: #{tpu_custom_call.1} parent=31 // pred_fallthru
          _
        // Predicated region
        $region37: #{tpu_custom_call.1} parent=31 // pred_check
          %p2451 = pneg %p143
        $region38: #{tpu_custom_call.1} parent=31 // pred_check_branch
          %2453 = sbr.rel (%p2451) target = $region40
        $region39: #{tpu_custom_call.1} parent=31 // pred_region
          _
        $region40: #{tpu_custom_call.1} parent=31 // pred_fallthru
          _
        // Predicated region
        $region41: #{tpu_custom_call.1} parent=31 // pred_check
          %p2454 = pneg %p169
        $region42: #{tpu_custom_call.1} parent=31 // pred_check_branch
          %2456 = sbr.rel (%p2454) target = $region44
        $region43: #{tpu_custom_call.1} parent=31 // pred_region
          _
        $region44: #{tpu_custom_call.1} parent=31 // pred_fallthru
          _
        // Predicated region
        $region45: #{tpu_custom_call.1} parent=31 // pred_check
          %p2457 = pneg %p195
        $region46: #{tpu_custom_call.1} parent=31 // pred_check_branch
          %2459 = sbr.rel (%p2457) target = $region48
        $region47: #{tpu_custom_call.1} parent=31 // pred_region
          _
        $region48: #{tpu_custom_call.1} parent=31 // pred_fallthru
          _
      $region32: #{tpu_custom_call.1} parent=5 // pred_fallthru
        _
      %p2460 = scmp.le.s32.totalorder 2, %s16
      // Predicated region
      $region49: #{tpu_custom_call.1} parent=5 // pred_check
        %p2461 = pneg %p2460
      $region50: #{tpu_custom_call.1} parent=5 // pred_check_branch
        %2463 = sbr.rel (%p2461) target = $region52
      $region51: #{tpu_custom_call.1} parent=5 // pred_region
        %s2464 = ssub.s32 %s16, 2
        // Predicated region
        $region53: #{tpu_custom_call.1} parent=51 // pred_check
          %p2465 = pneg %p123
        $region54: #{tpu_custom_call.1} parent=51 // pred_check_branch
          %2467 = sbr.rel (%p2465) target = $region56
        $region55: #{tpu_custom_call.1} parent=51 // pred_region
          %s2468 = sand.u32 %s108, 1
          %s2469 = scalar_lea.sflag [#allocation3], %s2468
          %s2470 = sand.u32 %s108, 1
          %s2471 = smul.addr %s2470, 512
          %s2472 = scalar_lea.vmem [#allocation2], %s2471
          %2473 = dma.done %s2469, 8192
        $region56: #{tpu_custom_call.1} parent=51 // pred_fallthru
          _
        // Predicated region
        $region57: #{tpu_custom_call.1} parent=51 // pred_check
          %p2474 = pneg %p149
        $region58: #{tpu_custom_call.1} parent=51 // pred_check_branch
          %2476 = sbr.rel (%p2474) target = $region60
        $region59: #{tpu_custom_call.1} parent=51 // pred_region
          %p2477 = scmp.lt.s32.totalorder %s22, 1
          %s2478 = scalar_select %p2477, %s22, 1
          %s2479 = scalar_lea.vmem %s4, %s2478
        $region60: #{tpu_custom_call.1} parent=51 // pred_fallthru
          _
        // Predicated region
        $region61: #{tpu_custom_call.1} parent=51 // pred_check
          %p2480 = pneg %p175
        $region62: #{tpu_custom_call.1} parent=51 // pred_check_branch
          %2482 = sbr.rel (%p2480) target = $region64
        $region63: #{tpu_custom_call.1} parent=51 // pred_region
          %p2483 = scmp.lt.s32.totalorder %s22, 1
          %s2484 = scalar_select %p2483, %s22, 1
          %s2485 = scalar_lea.vmem %s5, %s2484
        $region64: #{tpu_custom_call.1} parent=51 // pred_fallthru
          _
        // Predicated region
        $region65: #{tpu_custom_call.1} parent=51 // pred_check
          %p2486 = pneg %p201
        $region66: #{tpu_custom_call.1} parent=51 // pred_check_branch
          %2488 = sbr.rel (%p2486) target = $region68
        $region67: #{tpu_custom_call.1} parent=51 // pred_region
          %p2489 = scmp.lt.s32.totalorder %s22, 1
          %s2490 = scalar_select %p2489, %s22, 1
          %s2491 = scalar_lea.vmem %s6, %s2490
        $region68: #{tpu_custom_call.1} parent=51 // pred_fallthru
          _
      $region52: #{tpu_custom_call.1} parent=5 // pred_fallthru
        _
    $region6: #{tpu_custom_call.1} parent=1 // loop_footer
      %s20 = sadd.s32 1, %s16
    $region7: #{tpu_custom_call.1} parent=1 // loop_footer_branch
      %15 = sbr.rel target = $region3
    $region8: #{tpu_custom_call.1} parent=1 // loop_exit
      _
    %2492 = vsyncpa [#allocation3], 1
    %s2493 = scalar_lea.sflag [#allocation3], 1
    %2494 = vsyncpa %s2493, 1

</llo_original>
